<compile_context>
chip_gen: v5e
topology: v5e:2x2
jax: 0.10.0
libtpu: 0.0.40
codegen_flags: <defaults>
</compile_context>

<pallas_src>
import functools
import math

import jax
import jax.numpy as jnp
from jax.experimental import pallas as pl
from jax.experimental.pallas import tpu as pltpu


def _round_up(v, m):
    return (v + m - 1) // m * m


def _swish(h):
    return h * jax.nn.sigmoid(h)


def _fc(h, w_ref, b_ref, compute_dtype):
    # h: (tile_n, d_in) f32 ; w_ref: (d_in, d_out) compute_dtype ; b_ref: (1, d_out) f32
    return jnp.dot(h.astype(compute_dtype), w_ref[...],
                   preferred_element_type=jnp.float32) + b_ref[...]


def ensemble_fused_kernel(
    # inputs
    xy_ref,
    w1, b1, w2, b2, w3, b3, w4, b4, w5, b5,
    maxlv_ref, minlv_ref,
    # output (single lane-dense packed tensor)
    out_ref,
    *, o_pad: int, ret_log_var: bool, compute_dtype,
):
    h = xy_ref[...].astype(jnp.float32)              # (tile_n, d_in)

    # fused (block-diagonal) 5-layer MLP: both branches in one MXU chain
    h = _swish(_fc(h, w1, b1, compute_dtype))
    h = _swish(_fc(h, w2, b2, compute_dtype))
    h = _swish(_fc(h, w3, b3, compute_dtype))
    h = _swish(_fc(h, w4, b4, compute_dtype))
    raw5 = _fc(h, w5, b5, compute_dtype)             # (tile_n, 4*o_pad)

    # 128-aligned column groups -> free slices
    sa_mean = raw5[:, 0 * o_pad:1 * o_pad]
    s_mean = raw5[:, 1 * o_pad:2 * o_pad]
    sa_lv_r = raw5[:, 2 * o_pad:3 * o_pad]
    s_lv_r = raw5[:, 3 * o_pad:4 * o_pad]

    max_lv = maxlv_ref[...]                          # (1, o_pad)
    min_lv = minlv_ref[...]

    sa_lv = max_lv - jax.nn.softplus(max_lv - sa_lv_r)
    sa_lv = min_lv + jax.nn.softplus(sa_lv - min_lv)
    s_lv = max_lv - jax.nn.softplus(max_lv - s_lv_r)
    s_lv = min_lv + jax.nn.softplus(s_lv - min_lv)

    mean = sa_mean + s_mean
    logvar = jnp.logaddexp(sa_lv, s_lv)              # == log(exp(sa_lv) + exp(s_lv))
    second = logvar if ret_log_var else jnp.exp(logvar)

    # one lane-dense packed store: [mean | var | sa_mean | s_mean | sa_lv | s_lv]
    out_ref[...] = jnp.concatenate(
        [mean, second, sa_mean, s_mean, sa_lv, s_lv], axis=-1)


def _pack_params(params, dsa, ds, output_dim, hidden, compute_dtype):
    """Build the fused, lane-padded, block-diagonal parameter tensors."""
    E = params["nn1"][0].shape[0]
    H = hidden
    d_in = _round_up(dsa + ds, 128)
    hid2 = _round_up(2 * H, 128)
    o_pad = _round_up(output_dim, 128)
    f32 = jnp.float32

    def hidden_fused(nn_name, sn_name, din_pad, nn_rows, sn_rows):
        nn_w, nn_b = params[nn_name]
        sn_w, sn_b = params[sn_name]
        w = jnp.zeros((E, din_pad, hid2), f32)
        w = w.at[:, nn_rows[0]:nn_rows[1], 0:H].set(nn_w)
        w = w.at[:, sn_rows[0]:sn_rows[1], H:2 * H].set(sn_w)
        b = jnp.zeros((E, 1, hid2), f32)
        b = b.at[:, 0, 0:H].set(nn_b)
        b = b.at[:, 0, H:2 * H].set(sn_b)
        return w.astype(compute_dtype), b

    w1, b1 = hidden_fused("nn1", "sn1", d_in, (0, dsa), (dsa, dsa + ds))
    w2, b2 = hidden_fused("nn2", "sn2", hid2, (0, H), (H, 2 * H))
    w3, b3 = hidden_fused("nn3", "sn3", hid2, (0, H), (H, 2 * H))
    w4, b4 = hidden_fused("nn4", "sn4", hid2, (0, H), (H, 2 * H))

    # layer 5: four 128-aligned column groups [sa_mean | s_mean | sa_lv | s_lv]
    nn5_w, nn5_b = params["nn5"]
    sn5_w, sn5_b = params["sn5"]
    w5 = jnp.zeros((E, hid2, 4 * o_pad), f32)
    w5 = w5.at[:, 0:H, 0 * o_pad:0 * o_pad + output_dim].set(nn5_w[:, :, :output_dim])
    w5 = w5.at[:, 0:H, 2 * o_pad:2 * o_pad + output_dim].set(nn5_w[:, :, output_dim:])
    w5 = w5.at[:, H:2 * H, 1 * o_pad:1 * o_pad + output_dim].set(sn5_w[:, :, :output_dim])
    w5 = w5.at[:, H:2 * H, 3 * o_pad:3 * o_pad + output_dim].set(sn5_w[:, :, output_dim:])
    b5 = jnp.zeros((E, 1, 4 * o_pad), f32)
    b5 = b5.at[:, 0, 0 * o_pad:0 * o_pad + output_dim].set(nn5_b[:, :output_dim])
    b5 = b5.at[:, 0, 2 * o_pad:2 * o_pad + output_dim].set(nn5_b[:, output_dim:])
    b5 = b5.at[:, 0, 1 * o_pad:1 * o_pad + output_dim].set(sn5_b[:, :output_dim])
    b5 = b5.at[:, 0, 3 * o_pad:3 * o_pad + output_dim].set(sn5_b[:, output_dim:])
    w5 = w5.astype(compute_dtype)

    max_lv = jnp.zeros((1, o_pad), f32).at[:, :output_dim].set(params["max_logvar"])
    min_lv = jnp.zeros((1, o_pad), f32).at[:, :output_dim].set(params["min_logvar"])

    fused = (w1, b1, w2, b2, w3, b3, w4, b4, w5, b5, max_lv, min_lv)
    return fused, (d_in, hid2, o_pad)


def ensemble_model_forward(x, y, params, output_dim, ret_log_var=False,
                           tile_n=512, compute_dtype=jnp.float32):
    """Fused Pallas forward.  Returns (mean, var_or_logvar, sa_mean, s_mean, sa_lv, s_lv)."""
    E, N, dsa = x.shape
    ds = y.shape[2]
    hidden = params["nn2"][0].shape[1]

    fused, (d_in, hid2, o_pad) = _pack_params(
        params, dsa, ds, output_dim, hidden, compute_dtype)
    (w1, b1, w2, b2, w3, b3, w4, b4, w5, b5, max_lv, min_lv) = fused

    # batch tiling: many pipeline steps per ensemble member, weights stay resident
    tile_n = max(8, min(_round_up(tile_n, 8), _round_up(N, 8)))
    n_pad = _round_up(N, tile_n)

    # pack [x | y] into one lane-padded input
    xy = jnp.zeros((E, n_pad, d_in), jnp.float32)
    xy = xy.at[:, :N, :dsa].set(x.astype(jnp.float32))
    xy = xy.at[:, :N, dsa:dsa + ds].set(y.astype(jnp.float32))
    xy = xy.astype(compute_dtype)

    grid = (E, n_pad // tile_n)

    def wspec(din, dout):
        return pl.BlockSpec((None, din, dout), lambda e, n: (e, 0, 0))

    def bspec(dout):
        return pl.BlockSpec((None, 1, dout), lambda e, n: (e, 0, 0))

    in_specs = [
        pl.BlockSpec((None, tile_n, d_in), lambda e, n: (e, n, 0)),
        wspec(d_in, hid2), bspec(hid2),
        wspec(hid2, hid2), bspec(hid2),
        wspec(hid2, hid2), bspec(hid2),
        wspec(hid2, hid2), bspec(hid2),
        wspec(hid2, 4 * o_pad), bspec(4 * o_pad),
        pl.BlockSpec((1, o_pad), lambda e, n: (0, 0)),
        pl.BlockSpec((1, o_pad), lambda e, n: (0, 0)),
    ]
    out_spec = pl.BlockSpec((None, tile_n, 6 * o_pad), lambda e, n: (e, n, 0))
    out_shape = jax.ShapeDtypeStruct((E, n_pad, 6 * o_pad), jnp.float32)

    # explicit VMEM budget (double-buffered tiles + resident weights + activation scratch),
    # kept below v7x's 64 MiB physical VMEM and at least the 32 MiB scoped default.
    itemsize = jnp.dtype(compute_dtype).itemsize
    w_bytes = (d_in * hid2 + 3 * hid2 * hid2 + hid2 * 4 * o_pad) * itemsize \
        + (4 * hid2 + 4 * o_pad) * 4
    tile_bytes = tile_n * d_in * itemsize + tile_n * 6 * o_pad * 4
    act_bytes = 8 * tile_n * max(hid2, 4 * o_pad) * 4
    est = 2 * tile_bytes + 2 * w_bytes + act_bytes
    vmem_limit = int(min(max(2 * est, 32 * 1024 * 1024), 56 * 1024 * 1024))

    kernel = functools.partial(
        ensemble_fused_kernel, o_pad=o_pad, ret_log_var=ret_log_var,
        compute_dtype=compute_dtype)

    packed_out = pl.pallas_call(
        kernel,
        out_shape=out_shape,
        grid_spec=pltpu.PrefetchScalarGridSpec(
            num_scalar_prefetch=0,
            grid=grid,
            in_specs=in_specs,
            out_specs=out_spec,
        ),
        compiler_params=pltpu.CompilerParams(
            dimension_semantics=("parallel", "parallel"),
            vmem_limit_bytes=vmem_limit,
        ),
    )(xy, w1, b1, w2, b2, w3, b3, w4, b4, w5, b5, max_lv, min_lv)

    packed_out = packed_out[:, :N, :]

    def grp(i):
        return packed_out[:, :, i * o_pad: i * o_pad + output_dim]

    return grp(0), grp(1), grp(2), grp(3), grp(4), grp(5)


def init_ensemble_params(key, state_size, action_size, reward_size,
                         ensemble_size, hidden_size):
    """Deterministic init matching init_weights: truncated-normal weights
    (std = 1/(2*sqrt(in_features)), truncated at +-2 std), zero biases."""
    output_dim = state_size + reward_size
    layer_dims = {
        "nn1": (state_size + action_size, hidden_size),
        "nn2": (hidden_size, hidden_size),
        "nn3": (hidden_size, hidden_size),
        "nn4": (hidden_size, hidden_size),
        "nn5": (hidden_size, output_dim * 2),
        "sn1": (state_size, hidden_size),
        "sn2": (hidden_size, hidden_size),
        "sn3": (hidden_size, hidden_size),
        "sn4": (hidden_size, hidden_size),
        "sn5": (hidden_size, output_dim * 2),
    }
    params = {}
    keys = jax.random.split(key, len(layer_dims))
    for k, (name, (din, dout)) in zip(keys, layer_dims.items()):
        std = 1.0 / (2.0 * jnp.sqrt(float(din)))
        w = std * jax.random.truncated_normal(
            k, -2.0, 2.0, (ensemble_size, din, dout), dtype=jnp.float32)
        b = jnp.zeros((ensemble_size, dout), dtype=jnp.float32)
        params[name] = (w, b)
    params["max_logvar"] = jnp.ones((1, output_dim), jnp.float32) * 0.5
    params["min_logvar"] = -jnp.ones((1, output_dim), jnp.float32) * 10.0
    return params, output_dim


def _reference_forward(x, y, params, output_dim, ret_log_var=False):
    """Pure-JAX reference of EnsembleModel.forward for correctness checking."""
    hi = jax.lax.Precision.HIGHEST

    def fc(h, name):
        w, b = params[name]
        return jnp.einsum("eni,eio->eno", h, w, precision=hi) + b[:, None, :]

    def swish(h):
        return h * jax.nn.sigmoid(h)

    h = swish(fc(x, "nn1"))
    h = swish(fc(h, "nn2"))
    h = swish(fc(h, "nn3"))
    h = swish(fc(h, "nn4"))
    nn5 = fc(h, "nn5")
    g = swish(fc(y, "sn1"))
    g = swish(fc(g, "sn2"))
    g = swish(fc(g, "sn3"))
    g = swish(fc(g, "sn4"))
    sn5 = fc(g, "sn5")

    max_lv, min_lv = params["max_logvar"], params["min_logvar"]
    sa_mean = nn5[:, :, :output_dim]
    s_mean = sn5[:, :, :output_dim]
    mean = sa_mean + s_mean
    sa_lv = max_lv - jax.nn.softplus(max_lv - nn5[:, :, output_dim:])
    sa_lv = min_lv + jax.nn.softplus(sa_lv - min_lv)
    s_lv = max_lv - jax.nn.softplus(max_lv - sn5[:, :, output_dim:])
    s_lv = min_lv + jax.nn.softplus(s_lv - min_lv)
    logvar = jnp.log(jnp.exp(sa_lv) + jnp.exp(s_lv))
    second = logvar if ret_log_var else jnp.exp(logvar)
    return mean, second, sa_mean, s_mean, sa_lv, s_lv


if __name__ == "__main__":
    # Small, forward-consistent shapes (batch=10 also exercises N padding).
    state_size, action_size, reward_size = 5, 3, 1
    ensemble_size, hidden_size, batch = 4, 32, 10

    key = jax.random.PRNGKey(0)
    pkey, xkey, ykey = jax.random.split(key, 3)
    params, output_dim = init_ensemble_params(
        pkey, state_size, action_size, reward_size, ensemble_size, hidden_size)

    x = jax.random.normal(
        xkey, (ensemble_size, batch, state_size + action_size), jnp.float32)
    y = jax.random.normal(
        ykey, (ensemble_size, batch, state_size), jnp.float32)

    for ret_log_var in (False, True):
        outs = ensemble_model_forward(x, y, params, output_dim,
                                      ret_log_var=ret_log_var)
        outs = jax.block_until_ready(outs)
        refs = _reference_forward(x, y, params, output_dim,
                                  ret_log_var=ret_log_var)
        for o, r in zip(outs, refs):
            assert o.shape == r.shape, (o.shape, r.shape)
            err = float(jnp.max(jnp.abs(o - r)))
            assert err < 1e-4, err

    # TODO(synk): for production bf16 on v6e/v7x pass compute_dtype=jnp.bfloat16
    # (matmul inputs only; accumulation/epilogue stay f32) and loosen tolerances.
    print("KERNEL_OK")
</pallas_src>

<mosaic_0001>
module attributes {stable_mosaic.version = 11 : i64} {
  func.func @ensemble_fused_kernel(%arg0: i32, %arg1: i32, %arg2: memref<1x16x128xf32, #tpu.memory_space<vmem>>, %arg3: memref<1x128x128xf32, #tpu.memory_space<vmem>>, %arg4: memref<1x1x128xf32, #tpu.memory_space<vmem>>, %arg5: memref<1x128x128xf32, #tpu.memory_space<vmem>>, %arg6: memref<1x1x128xf32, #tpu.memory_space<vmem>>, %arg7: memref<1x128x128xf32, #tpu.memory_space<vmem>>, %arg8: memref<1x1x128xf32, #tpu.memory_space<vmem>>, %arg9: memref<1x128x128xf32, #tpu.memory_space<vmem>>, %arg10: memref<1x1x128xf32, #tpu.memory_space<vmem>>, %arg11: memref<1x128x512xf32, #tpu.memory_space<vmem>>, %arg12: memref<1x1x512xf32, #tpu.memory_space<vmem>>, %arg13: memref<1x128xf32, #tpu.memory_space<vmem>>, %arg14: memref<1x128xf32, #tpu.memory_space<vmem>>, %arg15: memref<1x16x768xf32, #tpu.memory_space<vmem>>) attributes {dimension_semantics = [#tpu.dimension_semantics<parallel>, #tpu.dimension_semantics<parallel>], iteration_bounds = array<i64: 4, 1>, scalar_prefetch = 0 : i64, scratch_operands = 0 : i64, tpu.core_type = #tpu.core_type<tc>, window_params = [{transform_indices = @transform_0, window_bounds = array<i64: 1, 16, 128>}, {transform_indices = @transform_1, window_bounds = array<i64: 1, 128, 128>}, {transform_indices = @transform_2, window_bounds = array<i64: 1, 1, 128>}, {transform_indices = @transform_3, window_bounds = array<i64: 1, 128, 128>}, {transform_indices = @transform_4, window_bounds = array<i64: 1, 1, 128>}, {transform_indices = @transform_5, window_bounds = array<i64: 1, 128, 128>}, {transform_indices = @transform_6, window_bounds = array<i64: 1, 1, 128>}, {transform_indices = @transform_7, window_bounds = array<i64: 1, 128, 128>}, {transform_indices = @transform_8, window_bounds = array<i64: 1, 1, 128>}, {transform_indices = @transform_9, window_bounds = array<i64: 1, 128, 512>}, {transform_indices = @transform_10, window_bounds = array<i64: 1, 1, 512>}, {pipeline_mode = #tpu.pipeline_mode<synchronous>, transform_indices = @transform_11, window_bounds = array<i64: 1, 128>}, {pipeline_mode = #tpu.pipeline_mode<synchronous>, transform_indices = @transform_12, window_bounds = array<i64: 1, 128>}, {transform_indices = @transform_13, window_bounds = array<i64: 1, 16, 768>}]} {
    %c0 = arith.constant 0 : index
    %c0_0 = arith.constant 0 : index
    %c0_1 = arith.constant 0 : index
    %0 = vector.load %arg2[%c0, %c0_0, %c0_1] : memref<1x16x128xf32, #tpu.memory_space<vmem>>, vector<1x16x128xf32>
    %1 = vector.shape_cast %0 : vector<1x16x128xf32> to vector<16x128xf32>
    %c0_2 = arith.constant 0 : index
    %c0_3 = arith.constant 0 : index
    %c0_4 = arith.constant 0 : index
    %2 = vector.load %arg3[%c0_2, %c0_3, %c0_4] : memref<1x128x128xf32, #tpu.memory_space<vmem>>, vector<1x128x128xf32>
    %3 = vector.shape_cast %2 : vector<1x128x128xf32> to vector<128x128xf32>
    %cst = arith.constant dense<0.000000e+00> : vector<16x128xf32>
    %4 = tpu.matmul %1, %3, %cst {dimension_numbers = #tpu.dot_dimension_numbers<[1], [0], [0], [1], [0, 0, 1, 1], [], []>} : vector<16x128xf32>, vector<128x128xf32>, vector<16x128xf32> -> vector<16x128xf32>
    %c0_5 = arith.constant 0 : index
    %c0_6 = arith.constant 0 : index
    %c0_7 = arith.constant 0 : index
    %5 = vector.load %arg4[%c0_5, %c0_6, %c0_7] : memref<1x1x128xf32, #tpu.memory_space<vmem>>, vector<1x1x128xf32>
    %6 = vector.shape_cast %5 : vector<1x1x128xf32> to vector<1x128xf32>
    %7 = vector.broadcast %6 : vector<1x128xf32> to vector<16x128xf32>
    %8 = arith.addf %4, %7 : vector<16x128xf32>
    %9 = arith.negf %8 : vector<16x128xf32>
    %10 = math.exp %9 : vector<16x128xf32>
    %cst_8 = arith.constant 1.000000e+00 : f32
    %11 = vector.broadcast %cst_8 : f32 to vector<16x128xf32>
    %12 = arith.addf %11, %10 : vector<16x128xf32>
    %13 = arith.divf %11, %12 : vector<16x128xf32>
    %14 = arith.mulf %8, %13 : vector<16x128xf32>
    %c0_9 = arith.constant 0 : index
    %c0_10 = arith.constant 0 : index
    %c0_11 = arith.constant 0 : index
    %15 = vector.load %arg5[%c0_9, %c0_10, %c0_11] : memref<1x128x128xf32, #tpu.memory_space<vmem>>, vector<1x128x128xf32>
    %16 = vector.shape_cast %15 : vector<1x128x128xf32> to vector<128x128xf32>
    %cst_12 = arith.constant dense<0.000000e+00> : vector<16x128xf32>
    %17 = tpu.matmul %14, %16, %cst_12 {dimension_numbers = #tpu.dot_dimension_numbers<[1], [0], [0], [1], [0, 0, 1, 1], [], []>} : vector<16x128xf32>, vector<128x128xf32>, vector<16x128xf32> -> vector<16x128xf32>
    %c0_13 = arith.constant 0 : index
    %c0_14 = arith.constant 0 : index
    %c0_15 = arith.constant 0 : index
    %18 = vector.load %arg6[%c0_13, %c0_14, %c0_15] : memref<1x1x128xf32, #tpu.memory_space<vmem>>, vector<1x1x128xf32>
    %19 = vector.shape_cast %18 : vector<1x1x128xf32> to vector<1x128xf32>
    %20 = vector.broadcast %19 : vector<1x128xf32> to vector<16x128xf32>
    %21 = arith.addf %17, %20 : vector<16x128xf32>
    %22 = arith.negf %21 : vector<16x128xf32>
    %23 = math.exp %22 : vector<16x128xf32>
    %cst_16 = arith.constant 1.000000e+00 : f32
    %24 = vector.broadcast %cst_16 : f32 to vector<16x128xf32>
    %25 = arith.addf %24, %23 : vector<16x128xf32>
    %26 = arith.divf %24, %25 : vector<16x128xf32>
    %27 = arith.mulf %21, %26 : vector<16x128xf32>
    %c0_17 = arith.constant 0 : index
    %c0_18 = arith.constant 0 : index
    %c0_19 = arith.constant 0 : index
    %28 = vector.load %arg7[%c0_17, %c0_18, %c0_19] : memref<1x128x128xf32, #tpu.memory_space<vmem>>, vector<1x128x128xf32>
    %29 = vector.shape_cast %28 : vector<1x128x128xf32> to vector<128x128xf32>
    %cst_20 = arith.constant dense<0.000000e+00> : vector<16x128xf32>
    %30 = tpu.matmul %27, %29, %cst_20 {dimension_numbers = #tpu.dot_dimension_numbers<[1], [0], [0], [1], [0, 0, 1, 1], [], []>} : vector<16x128xf32>, vector<128x128xf32>, vector<16x128xf32> -> vector<16x128xf32>
    %c0_21 = arith.constant 0 : index
    %c0_22 = arith.constant 0 : index
    %c0_23 = arith.constant 0 : index
    %31 = vector.load %arg8[%c0_21, %c0_22, %c0_23] : memref<1x1x128xf32, #tpu.memory_space<vmem>>, vector<1x1x128xf32>
    %32 = vector.shape_cast %31 : vector<1x1x128xf32> to vector<1x128xf32>
    %33 = vector.broadcast %32 : vector<1x128xf32> to vector<16x128xf32>
    %34 = arith.addf %30, %33 : vector<16x128xf32>
    %35 = arith.negf %34 : vector<16x128xf32>
    %36 = math.exp %35 : vector<16x128xf32>
    %cst_24 = arith.constant 1.000000e+00 : f32
    %37 = vector.broadcast %cst_24 : f32 to vector<16x128xf32>
    %38 = arith.addf %37, %36 : vector<16x128xf32>
    %39 = arith.divf %37, %38 : vector<16x128xf32>
    %40 = arith.mulf %34, %39 : vector<16x128xf32>
    %c0_25 = arith.constant 0 : index
    %c0_26 = arith.constant 0 : index
    %c0_27 = arith.constant 0 : index
    %41 = vector.load %arg9[%c0_25, %c0_26, %c0_27] : memref<1x128x128xf32, #tpu.memory_space<vmem>>, vector<1x128x128xf32>
    %42 = vector.shape_cast %41 : vector<1x128x128xf32> to vector<128x128xf32>
    %cst_28 = arith.constant dense<0.000000e+00> : vector<16x128xf32>
    %43 = tpu.matmul %40, %42, %cst_28 {dimension_numbers = #tpu.dot_dimension_numbers<[1], [0], [0], [1], [0, 0, 1, 1], [], []>} : vector<16x128xf32>, vector<128x128xf32>, vector<16x128xf32> -> vector<16x128xf32>
    %c0_29 = arith.constant 0 : index
    %c0_30 = arith.constant 0 : index
    %c0_31 = arith.constant 0 : index
    %44 = vector.load %arg10[%c0_29, %c0_30, %c0_31] : memref<1x1x128xf32, #tpu.memory_space<vmem>>, vector<1x1x128xf32>
    %45 = vector.shape_cast %44 : vector<1x1x128xf32> to vector<1x128xf32>
    %46 = vector.broadcast %45 : vector<1x128xf32> to vector<16x128xf32>
    %47 = arith.addf %43, %46 : vector<16x128xf32>
    %48 = arith.negf %47 : vector<16x128xf32>
    %49 = math.exp %48 : vector<16x128xf32>
    %cst_32 = arith.constant 1.000000e+00 : f32
    %50 = vector.broadcast %cst_32 : f32 to vector<16x128xf32>
    %51 = arith.addf %50, %49 : vector<16x128xf32>
    %52 = arith.divf %50, %51 : vector<16x128xf32>
    %53 = arith.mulf %47, %52 : vector<16x128xf32>
    %c0_33 = arith.constant 0 : index
    %c0_34 = arith.constant 0 : index
    %c0_35 = arith.constant 0 : index
    %54 = vector.load %arg11[%c0_33, %c0_34, %c0_35] : memref<1x128x512xf32, #tpu.memory_space<vmem>>, vector<1x128x512xf32>
    %55 = vector.shape_cast %54 : vector<1x128x512xf32> to vector<128x512xf32>
    %cst_36 = arith.constant dense<0.000000e+00> : vector<16x512xf32>
    %56 = tpu.matmul %53, %55, %cst_36 {dimension_numbers = #tpu.dot_dimension_numbers<[1], [0], [0], [1], [0, 0, 1, 1], [], []>} : vector<16x128xf32>, vector<128x512xf32>, vector<16x512xf32> -> vector<16x512xf32>
    %c0_37 = arith.constant 0 : index
    %c0_38 = arith.constant 0 : index
    %c0_39 = arith.constant 0 : index
    %57 = vector.load %arg12[%c0_37, %c0_38, %c0_39] : memref<1x1x512xf32, #tpu.memory_space<vmem>>, vector<1x1x512xf32>
    %58 = vector.shape_cast %57 : vector<1x1x512xf32> to vector<1x512xf32>
    %59 = vector.broadcast %58 : vector<1x512xf32> to vector<16x512xf32>
    %60 = arith.addf %56, %59 : vector<16x512xf32>
    %61 = vector.extract_strided_slice %60 {offsets = [0, 0], sizes = [16, 128], strides = [1, 1]} : vector<16x512xf32> to vector<16x128xf32>
    %62 = vector.extract_strided_slice %60 {offsets = [0, 128], sizes = [16, 128], strides = [1, 1]} : vector<16x512xf32> to vector<16x128xf32>
    %63 = vector.extract_strided_slice %60 {offsets = [0, 256], sizes = [16, 128], strides = [1, 1]} : vector<16x512xf32> to vector<16x128xf32>
    %64 = vector.extract_strided_slice %60 {offsets = [0, 384], sizes = [16, 128], strides = [1, 1]} : vector<16x512xf32> to vector<16x128xf32>
    %c0_40 = arith.constant 0 : index
    %c0_41 = arith.constant 0 : index
    %65 = vector.load %arg13[%c0_40, %c0_41] : memref<1x128xf32, #tpu.memory_space<vmem>>, vector<1x128xf32>
    %c0_42 = arith.constant 0 : index
    %c0_43 = arith.constant 0 : index
    %66 = vector.load %arg14[%c0_42, %c0_43] : memref<1x128xf32, #tpu.memory_space<vmem>>, vector<1x128xf32>
    %67 = vector.broadcast %65 : vector<1x128xf32> to vector<16x128xf32>
    %68 = arith.subf %67, %63 : vector<16x128xf32>
    %cst_44 = arith.constant 0.000000e+00 : f32
    %69 = vector.broadcast %cst_44 : f32 to vector<16x128xf32>
    %70 = arith.maximumf %68, %69 : vector<16x128xf32>
    %71 = vector.broadcast %cst_44 : f32 to vector<16x128xf32>
    %72 = arith.subf %68, %71 : vector<16x128xf32>
    %73 = arith.cmpf one, %72, %72 : vector<16x128xf32>
    %74 = vector.broadcast %cst_44 : f32 to vector<16x128xf32>
    %75 = arith.addf %68, %74 : vector<16x128xf32>
    %76 = math.absf %72 : vector<16x128xf32>
    %cst_45 = arith.constant 0.000000e+00 : f32
    %77 = vector.broadcast %cst_45 : f32 to vector<16x128xf32>
    %78 = arith.subf %77, %76 : vector<16x128xf32>
    %79 = math.exp %78 : vector<16x128xf32>
    %80 = math.log1p %79 : vector<16x128xf32>
    %81 = arith.addf %70, %80 : vector<16x128xf32>
    %82 = arith.select %73, %75, %81 : vector<16x128xi1>, vector<16x128xf32>
    %83 = vector.broadcast %65 : vector<1x128xf32> to vector<16x128xf32>
    %84 = arith.subf %83, %82 : vector<16x128xf32>
    %85 = vector.broadcast %66 : vector<1x128xf32> to vector<16x128xf32>
    %86 = arith.subf %84, %85 : vector<16x128xf32>
    %cst_46 = arith.constant 0.000000e+00 : f32
    %87 = vector.broadcast %cst_46 : f32 to vector<16x128xf32>
    %88 = arith.maximumf %86, %87 : vector<16x128xf32>
    %89 = vector.broadcast %cst_46 : f32 to vector<16x128xf32>
    %90 = arith.subf %86, %89 : vector<16x128xf32>
    %91 = arith.cmpf one, %90, %90 : vector<16x128xf32>
    %92 = vector.broadcast %cst_46 : f32 to vector<16x128xf32>
    %93 = arith.addf %86, %92 : vector<16x128xf32>
    %94 = math.absf %90 : vector<16x128xf32>
    %cst_47 = arith.constant 0.000000e+00 : f32
    %95 = vector.broadcast %cst_47 : f32 to vector<16x128xf32>
    %96 = arith.subf %95, %94 : vector<16x128xf32>
    %97 = math.exp %96 : vector<16x128xf32>
    %98 = math.log1p %97 : vector<16x128xf32>
    %99 = arith.addf %88, %98 : vector<16x128xf32>
    %100 = arith.select %91, %93, %99 : vector<16x128xi1>, vector<16x128xf32>
    %101 = vector.broadcast %66 : vector<1x128xf32> to vector<16x128xf32>
    %102 = arith.addf %101, %100 : vector<16x128xf32>
    %103 = vector.broadcast %65 : vector<1x128xf32> to vector<16x128xf32>
    %104 = arith.subf %103, %64 : vector<16x128xf32>
    %cst_48 = arith.constant 0.000000e+00 : f32
    %105 = vector.broadcast %cst_48 : f32 to vector<16x128xf32>
    %106 = arith.maximumf %104, %105 : vector<16x128xf32>
    %107 = vector.broadcast %cst_48 : f32 to vector<16x128xf32>
    %108 = arith.subf %104, %107 : vector<16x128xf32>
    %109 = arith.cmpf one, %108, %108 : vector<16x128xf32>
    %110 = vector.broadcast %cst_48 : f32 to vector<16x128xf32>
    %111 = arith.addf %104, %110 : vector<16x128xf32>
    %112 = math.absf %108 : vector<16x128xf32>
    %cst_49 = arith.constant 0.000000e+00 : f32
    %113 = vector.broadcast %cst_49 : f32 to vector<16x128xf32>
    %114 = arith.subf %113, %112 : vector<16x128xf32>
    %115 = math.exp %114 : vector<16x128xf32>
    %116 = math.log1p %115 : vector<16x128xf32>
    %117 = arith.addf %106, %116 : vector<16x128xf32>
    %118 = arith.select %109, %111, %117 : vector<16x128xi1>, vector<16x128xf32>
    %119 = vector.broadcast %65 : vector<1x128xf32> to vector<16x128xf32>
    %120 = arith.subf %119, %118 : vector<16x128xf32>
    %121 = vector.broadcast %66 : vector<1x128xf32> to vector<16x128xf32>
    %122 = arith.subf %120, %121 : vector<16x128xf32>
    %cst_50 = arith.constant 0.000000e+00 : f32
    %123 = vector.broadcast %cst_50 : f32 to vector<16x128xf32>
    %124 = arith.maximumf %122, %123 : vector<16x128xf32>
    %125 = vector.broadcast %cst_50 : f32 to vector<16x128xf32>
    %126 = arith.subf %122, %125 : vector<16x128xf32>
    %127 = arith.cmpf one, %126, %126 : vector<16x128xf32>
    %128 = vector.broadcast %cst_50 : f32 to vector<16x128xf32>
    %129 = arith.addf %122, %128 : vector<16x128xf32>
    %130 = math.absf %126 : vector<16x128xf32>
    %cst_51 = arith.constant 0.000000e+00 : f32
    %131 = vector.broadcast %cst_51 : f32 to vector<16x128xf32>
    %132 = arith.subf %131, %130 : vector<16x128xf32>
    %133 = math.exp %132 : vector<16x128xf32>
    %134 = math.log1p %133 : vector<16x128xf32>
    %135 = arith.addf %124, %134 : vector<16x128xf32>
    %136 = arith.select %127, %129, %135 : vector<16x128xi1>, vector<16x128xf32>
    %137 = vector.broadcast %66 : vector<1x128xf32> to vector<16x128xf32>
    %138 = arith.addf %137, %136 : vector<16x128xf32>
    %139 = arith.addf %61, %62 : vector<16x128xf32>
    %140 = arith.maximumf %102, %138 : vector<16x128xf32>
    %141 = arith.subf %102, %138 : vector<16x128xf32>
    %142 = arith.cmpf one, %141, %141 : vector<16x128xf32>
    %143 = arith.addf %102, %138 : vector<16x128xf32>
    %144 = math.absf %141 : vector<16x128xf32>
    %cst_52 = arith.constant 0.000000e+00 : f32
    %145 = vector.broadcast %cst_52 : f32 to vector<16x128xf32>
    %146 = arith.subf %145, %144 : vector<16x128xf32>
    %147 = math.exp %146 : vector<16x128xf32>
    %148 = math.log1p %147 : vector<16x128xf32>
    %149 = arith.addf %140, %148 : vector<16x128xf32>
    %150 = arith.select %142, %143, %149 : vector<16x128xi1>, vector<16x128xf32>
    %151 = math.exp %150 : vector<16x128xf32>
    %152 = tpu.concatenate %139, %151, %61, %62, %102, %138 in 1 : vector<16x128xf32>, vector<16x128xf32>, vector<16x128xf32>, vector<16x128xf32>, vector<16x128xf32>, vector<16x128xf32> -> vector<16x768xf32>
    %c0_53 = arith.constant 0 : index
    %c0_54 = arith.constant 0 : index
    %c0_55 = arith.constant 0 : index
    %153 = vector.load %arg15[%c0_53, %c0_54, %c0_55] : memref<1x16x768xf32, #tpu.memory_space<vmem>>, vector<1x16x768xf32>
    %154 = vector.shape_cast %153 : vector<1x16x768xf32> to vector<16x768xf32>
    %155 = vector.shape_cast %152 : vector<16x768xf32> to vector<1x16x768xf32>
    tpu.vector_store %arg15[%c0_53, %c0_54, %c0_55], %155 {strides = array<i32>} : memref<1x16x768xf32, #tpu.memory_space<vmem>>, vector<1x16x768xf32>,
    return
  }
  func.func @transform_0(%arg0: i32, %arg1: i32) -> (i32, i32, i32) {
    %c0_i32 = arith.constant 0 : i32
    %c0_i32_0 = arith.constant 0 : i32
    return %arg0, %arg1, %c0_i32 : i32, i32, i32
  }
  func.func @transform_1(%arg0: i32, %arg1: i32) -> (i32, i32, i32) {
    %c0_i32 = arith.constant 0 : i32
    %c0_i32_0 = arith.constant 0 : i32
    %c0_i32_1 = arith.constant 0 : i32
    return %arg0, %c0_i32, %c0_i32_0 : i32, i32, i32
  }
  func.func @transform_2(%arg0: i32, %arg1: i32) -> (i32, i32, i32) {
    %c0_i32 = arith.constant 0 : i32
    %c0_i32_0 = arith.constant 0 : i32
    %c0_i32_1 = arith.constant 0 : i32
    return %arg0, %c0_i32, %c0_i32_0 : i32, i32, i32
  }
  func.func @transform_3(%arg0: i32, %arg1: i32) -> (i32, i32, i32) {
    %c0_i32 = arith.constant 0 : i32
    %c0_i32_0 = arith.constant 0 : i32
    %c0_i32_1 = arith.constant 0 : i32
    return %arg0, %c0_i32, %c0_i32_0 : i32, i32, i32
  }
  func.func @transform_4(%arg0: i32, %arg1: i32) -> (i32, i32, i32) {
    %c0_i32 = arith.constant 0 : i32
    %c0_i32_0 = arith.constant 0 : i32
    %c0_i32_1 = arith.constant 0 : i32
    return %arg0, %c0_i32, %c0_i32_0 : i32, i32, i32
  }
  func.func @transform_5(%arg0: i32, %arg1: i32) -> (i32, i32, i32) {
    %c0_i32 = arith.constant 0 : i32
    %c0_i32_0 = arith.constant 0 : i32
    %c0_i32_1 = arith.constant 0 : i32
    return %arg0, %c0_i32, %c0_i32_0 : i32, i32, i32
  }
  func.func @transform_6(%arg0: i32, %arg1: i32) -> (i32, i32, i32) {
    %c0_i32 = arith.constant 0 : i32
    %c0_i32_0 = arith.constant 0 : i32
    %c0_i32_1 = arith.constant 0 : i32
    return %arg0, %c0_i32, %c0_i32_0 : i32, i32, i32
  }
  func.func @transform_7(%arg0: i32, %arg1: i32) -> (i32, i32, i32) {
    %c0_i32 = arith.constant 0 : i32
    %c0_i32_0 = arith.constant 0 : i32
    %c0_i32_1 = arith.constant 0 : i32
    return %arg0, %c0_i32, %c0_i32_0 : i32, i32, i32
  }
  func.func @transform_8(%arg0: i32, %arg1: i32) -> (i32, i32, i32) {
    %c0_i32 = arith.constant 0 : i32
    %c0_i32_0 = arith.constant 0 : i32
    %c0_i32_1 = arith.constant 0 : i32
    return %arg0, %c0_i32, %c0_i32_0 : i32, i32, i32
  }
  func.func @transform_9(%arg0: i32, %arg1: i32) -> (i32, i32, i32) {
    %c0_i32 = arith.constant 0 : i32
    %c0_i32_0 = arith.constant 0 : i32
    %c0_i32_1 = arith.constant 0 : i32
    return %arg0, %c0_i32, %c0_i32_0 : i32, i32, i32
  }
  func.func @transform_10(%arg0: i32, %arg1: i32) -> (i32, i32, i32) {
    %c0_i32 = arith.constant 0 : i32
    %c0_i32_0 = arith.constant 0 : i32
    %c0_i32_1 = arith.constant 0 : i32
    return %arg0, %c0_i32, %c0_i32_0 : i32, i32, i32
  }
  func.func @transform_11(%arg0: i32, %arg1: i32) -> (i32, i32) {
    %c0_i32 = arith.constant 0 : i32
    %c0_i32_0 = arith.constant 0 : i32
    %c0_i32_1 = arith.constant 0 : i32
    return %c0_i32, %c0_i32_0 : i32, i32
  }
  func.func @transform_12(%arg0: i32, %arg1: i32) -> (i32, i32) {
    %c0_i32 = arith.constant 0 : i32
    %c0_i32_0 = arith.constant 0 : i32
    %c0_i32_1 = arith.constant 0 : i32
    return %c0_i32, %c0_i32_0 : i32, i32
  }
  func.func @transform_13(%arg0: i32, %arg1: i32) -> (i32, i32, i32) {
    %c0_i32 = arith.constant 0 : i32
    %c0_i32_0 = arith.constant 0 : i32
    return %arg0, %arg1, %c0_i32 : i32, i32, i32
  }
}

</mosaic_0001>

<llo_original>
// kernel: tpu_custom_call.1
$region0: #{tpu_custom_call.1}
  #allocation0 [shape = 'u32[]', space=smem, size = 0x4, offset = 0x4, fixed_abs, tag = 'smem constant byte address 0x4 - core index']
  #allocation1 [shape = 'u32[72,128]{1,0:T(1,128)}', space=vmem, size = 0x9000, scoped, tag = 'internal scratch']
  %s0 = inlined_call_operand.hbm [shape: f32[4,16,128], index: 0, kind: input, shape index: {}]
  %s1 = inlined_call_operand.hbm [shape: f32[4,128,128], index: 1, kind: input, shape index: {}]
  %s2 = inlined_call_operand.hbm [shape: f32[4,1,128], index: 2, kind: input, shape index: {}]
  %s3 = inlined_call_operand.hbm [shape: f32[4,128,128], index: 3, kind: input, shape index: {}]
  %s4 = inlined_call_operand.hbm [shape: f32[4,1,128], index: 4, kind: input, shape index: {}]
  %s5 = inlined_call_operand.hbm [shape: f32[4,128,128], index: 5, kind: input, shape index: {}]
  %s6 = inlined_call_operand.vmem [shape: f32[4,1,128], index: 6, kind: input, shape index: {}]
  %s7 = inlined_call_operand.hbm [shape: f32[4,128,128], index: 7, kind: input, shape index: {}]
  %s8 = inlined_call_operand.hbm [shape: f32[4,1,128], index: 8, kind: input, shape index: {}]
  %s9 = inlined_call_operand.hbm [shape: f32[4,128,512], index: 9, kind: input, shape index: {}]
  %s10 = inlined_call_operand.hbm [shape: f32[4,1,512], index: 10, kind: input, shape index: {}]
  %s11 = inlined_call_operand.vmem [shape: f32[1,128], index: 11, kind: input, shape index: {}]
  %s12 = inlined_call_operand.vmem [shape: f32[1,128], index: 12, kind: input, shape index: {}]
  %s13 = inlined_call_operand.hbm [shape: f32[4,16,768], index: 13, kind: output, shape index: {}]
  %s14 = sld [smem:[#allocation0]]
  $region125: #{tpu_custom_call.1} parent=0
    _
  %s16 = ssub.s32 1, %s14
  %s17 = scalar_select 0, %s16, %s14
  $region1: #{tpu_custom_call.1} parent=0
    #allocation2 [shape = 'u8[16384]{0}', space=vmem, size = 0x4000, scoped, tag = 'input window, operand 0']
    #allocation3 [shape = 's32[2]{0}', space=sflag, size = 0x8, scoped, tag = 'scoped memory for tpu_custom_call.1']
    #allocation4 [shape = 's32[2]{0}', space=sflag, size = 0x8, scoped, tag = 'scoped memory for tpu_custom_call.1']
    #allocation5 [shape = 'u8[131072]{0}', space=vmem, size = 0x20000, scoped, tag = 'input window, operand 1']
    #allocation6 [shape = 's32[2]{0}', space=sflag, size = 0x8, scoped, tag = 'scoped memory for tpu_custom_call.1']
    #allocation7 [shape = 'u8[1024]{0}', space=vmem, size = 0x400, scoped, tag = 'input window, operand 2']
    #allocation8 [shape = 'u8[131072]{0}', space=vmem, size = 0x20000, scoped, tag = 'input window, operand 3']
    #allocation9 [shape = 's32[2]{0}', space=sflag, size = 0x8, scoped, tag = 'scoped memory for tpu_custom_call.1']
    #allocation10 [shape = 'u8[1024]{0}', space=vmem, size = 0x400, scoped, tag = 'input window, operand 4']
    #allocation11 [shape = 'u8[131072]{0}', space=vmem, size = 0x20000, scoped, tag = 'input window, operand 5']
    #allocation12 [shape = 's32[2]{0}', space=sflag, size = 0x8, scoped, tag = 'scoped memory for tpu_custom_call.1']
    #allocation13 [shape = 'u8[131072]{0}', space=vmem, size = 0x20000, scoped, tag = 'input window, operand 7']
    #allocation14 [shape = 'u8[1024]{0}', space=vmem, size = 0x400, scoped, tag = 'input window, operand 8']
    #allocation15 [shape = 's32[2]{0}', space=sflag, size = 0x8, scoped, tag = 'scoped memory for tpu_custom_call.1']
    #allocation16 [shape = 'u8[524288]{0}', space=vmem, size = 0x80000, scoped, tag = 'input window, operand 9']
    #allocation17 [shape = 'u8[4096]{0}', space=vmem, size = 0x1000, scoped, tag = 'input window, operand 10']
    #allocation18 [shape = 's32[2]{0}', space=sflag, size = 0x8, scoped, tag = 'scoped memory for tpu_custom_call.1']
    #allocation19 [shape = 'u8[98304]{0}', space=vmem, size = 0x18000, scoped, tag = 'output window, operand 0']
    %18 = vsyncpa [#allocation3], 0
    %s19 = scalar_lea.sflag [#allocation3], 1
    %20 = vsyncpa %s19, 0
    %21 = vsyncpa [#allocation6], 0
    %s22 = scalar_lea.sflag [#allocation6], 1
    %23 = vsyncpa %s22, 0
    %24 = vsyncpa [#allocation9], 0
    %s25 = scalar_lea.sflag [#allocation9], 1
    %26 = vsyncpa %s25, 0
    %27 = vsyncpa [#allocation12], 0
    %s28 = scalar_lea.sflag [#allocation12], 1
    %29 = vsyncpa %s28, 0
    %30 = vsyncpa [#allocation15], 0
    %s31 = scalar_lea.sflag [#allocation15], 1
    %32 = vsyncpa %s31, 0
    %33 = vsyncpa [#allocation18], 0
    %s34 = scalar_lea.sflag [#allocation18], 1
    %35 = vsyncpa %s34, 0
    %36 = vsyncpa [#allocation4], 0
    %s37 = scalar_lea.sflag [#allocation4], 1
    %38 = vsyncpa %s37, 0
    loop: start=0, step=1, limit=6
    $region2: #{tpu_custom_call.1} parent=1 // loop_pre_header
      _
    $region3: #{tpu_custom_call.1} parent=1 // loop_header
      %s40 = sphi 0, %s44
      %p41 = scmp.ge.s32.totalorder %s40, 6
      %s47 = sphi 0, %s59
      %s48 = sphi 0, %s55
      %s49 = sphi 0, %s47
      %s50 = sphi 0, %s48
      %s51 = sphi 0, %s49
      %s52 = sphi 0, %s50
      %s64 = sphi 0, %s66
      %s67 = sphi 0, %s64
      %s68 = sphi 0, %s67
      %s84 = sphi 0, %s68
      %s90 = sphi 0, %s92
      %s93 = sphi 0, %s90
      %s94 = sphi 0, %s93
      %s110 = sphi 0, %s94
      %s116 = sphi 0, %s118
      %s119 = sphi 0, %s116
      %s120 = sphi 0, %s119
      %s136 = sphi 0, %s120
      %s142 = sphi 0, %s144
      %s145 = sphi 0, %s142
      %s146 = sphi 0, %s145
      %s162 = sphi 0, %s146
      %s168 = sphi 0, %s170
      %s171 = sphi 0, %s168
      %s172 = sphi 0, %s171
      %s188 = sphi 0, %s172
      %s194 = sphi 0, %s196
      %s197 = sphi 0, %s194
      %s198 = sphi 0, %s197
      %s214 = sphi 0, %s198
      %s220 = sphi 0, %s222
      %s223 = sphi 0, %s220
      %s224 = sphi 0, %s223
      %s240 = sphi 0, %s224
      %s246 = sphi 0, %s248
      %s249 = sphi 0, %s246
      %s250 = sphi 0, %s249
      %s266 = sphi 0, %s250
      %s272 = sphi 0, %s274
      %s275 = sphi 0, %s272
      %s276 = sphi 0, %s275
      %s292 = sphi 0, %s276
      %s298 = sphi 0, %s300
      %s301 = sphi 0, %s298
      %s302 = sphi 0, %s301
      %s318 = sphi 0, %s302
      %s324 = sphi 0, %s326
      %s327 = sphi 0, %s324
      %s328 = sphi 0, %s327
      %s344 = sphi 0, %s328
      %s348 = sphi 0, %s348
      %s350 = sphi 0, %s348
      %s351 = sphi 0, %s350
      %s365 = sphi 0, %s351
      %s369 = sphi 0, %s369
      %s371 = sphi 0, %s369
      %s372 = sphi 0, %s371
      %s386 = sphi 0, %s372
      %s394 = sphi 0, %s396
      %s397 = sphi 0, %s394
      %s398 = sphi 0, %s397
      %s414 = sphi 0, %s398
    $region4: #{tpu_custom_call.1} parent=1 // loop_header_branch
      %43 = sbr.rel (%p41) target = $region8
    $region5: #{tpu_custom_call.1} parent=1 // loop_body
      %s45 = ssub.s32 %s40, 1
      %s46 = ssub.s32 %s40, 2
      %s53 = sadd.s32 1, %s48
      %p54 = scmp.ge.s32.totalorder %s53, 1
      %s55 = scalar_select %p54, 0, %s53
      %s56 = sadd.s32 1, %s47
      %s57 = scalar_select %p54, %s56, %s47
      %p58 = scmp.ge.s32.totalorder %s57, 4
      %s59 = scalar_select %p58, 0, %s57
      %s60 = ssub.s32 %s47, %s59
      %s61 = ssub.s32 %s48, %s55
      %s62 = sor.u32 %s60, %s61
      %p63 = scmp.eq.s32.totalorder %s62, 0
      %s65 = sadd.s32 %s64, 1
      %s66 = scalar_select %p63, %s64, %s65
      %p69 = pneg %p63
      %p70 = scmp.eq.s32.totalorder %s40, 3
      %p71 = por %p69, %p70
      %p72 = scmp.ne.s32.totalorder %s64, %s67
      %p73 = scmp.eq.s32.totalorder %s40, 0
      %p74 = por %p72, %p73
      %p75 = scmp.ne.s32.totalorder %s64, %s67
      %p76 = scmp.eq.s32.totalorder %s45, 3
      %p77 = por %p75, %p76
      %p78 = scmp.ne.s32.totalorder %s67, %s68
      %p79 = scmp.eq.s32.totalorder %s45, 0
      %p80 = por %p78, %p79
      %p81 = scmp.ne.s32.totalorder %s67, %s68
      %p82 = scmp.eq.s32.totalorder %s46, 3
      %p83 = por %p81, %p82
      %p85 = scmp.ne.s32.totalorder %s68, %s84
      %p86 = scmp.eq.s32.totalorder %s46, 0
      %p87 = por %p85, %p86
      %s88 = ssub.s32 %s47, %s59
      %p89 = scmp.eq.s32.totalorder %s88, 0
      %s91 = sadd.s32 %s90, 1
      %s92 = scalar_select %p89, %s90, %s91
      %p95 = pneg %p89
      %p96 = scmp.eq.s32.totalorder %s40, 3
      %p97 = por %p95, %p96
      %p98 = scmp.ne.s32.totalorder %s90, %s93
      %p99 = scmp.eq.s32.totalorder %s40, 0
      %p100 = por %p98, %p99
      %p101 = scmp.ne.s32.totalorder %s90, %s93
      %p102 = scmp.eq.s32.totalorder %s45, 3
      %p103 = por %p101, %p102
      %p104 = scmp.ne.s32.totalorder %s93, %s94
      %p105 = scmp.eq.s32.totalorder %s45, 0
      %p106 = por %p104, %p105
      %p107 = scmp.ne.s32.totalorder %s93, %s94
      %p108 = scmp.eq.s32.totalorder %s46, 3
      %p109 = por %p107, %p108
      %p111 = scmp.ne.s32.totalorder %s94, %s110
      %p112 = scmp.eq.s32.totalorder %s46, 0
      %p113 = por %p111, %p112
      %s114 = ssub.s32 %s47, %s59
      %p115 = scmp.eq.s32.totalorder %s114, 0
      %s117 = sadd.s32 %s116, 1
      %s118 = scalar_select %p115, %s116, %s117
      %p121 = pneg %p115
      %p122 = scmp.eq.s32.totalorder %s40, 3
      %p123 = por %p121, %p122
      %p124 = scmp.ne.s32.totalorder %s116, %s119
      %p125 = scmp.eq.s32.totalorder %s40, 0
      %p126 = por %p124, %p125
      %p127 = scmp.ne.s32.totalorder %s116, %s119
      %p128 = scmp.eq.s32.totalorder %s45, 3
      %p129 = por %p127, %p128
      %p130 = scmp.ne.s32.totalorder %s119, %s120
      %p131 = scmp.eq.s32.totalorder %s45, 0
      %p132 = por %p130, %p131
      %p133 = scmp.ne.s32.totalorder %s119, %s120
      %p134 = scmp.eq.s32.totalorder %s46, 3
      %p135 = por %p133, %p134
      %p137 = scmp.ne.s32.totalorder %s120, %s136
      %p138 = scmp.eq.s32.totalorder %s46, 0
      %p139 = por %p137, %p138
      %s140 = ssub.s32 %s47, %s59
      %p141 = scmp.eq.s32.totalorder %s140, 0
      %s143 = sadd.s32 %s142, 1
      %s144 = scalar_select %p141, %s142, %s143
      %p147 = pneg %p141
      %p148 = scmp.eq.s32.totalorder %s40, 3
      %p149 = por %p147, %p148
      %p150 = scmp.ne.s32.totalorder %s142, %s145
      %p151 = scmp.eq.s32.totalorder %s40, 0
      %p152 = por %p150, %p151
      %p153 = scmp.ne.s32.totalorder %s142, %s145
      %p154 = scmp.eq.s32.totalorder %s45, 3
      %p155 = por %p153, %p154
      %p156 = scmp.ne.s32.totalorder %s145, %s146
      %p157 = scmp.eq.s32.totalorder %s45, 0
      %p158 = por %p156, %p157
      %p159 = scmp.ne.s32.totalorder %s145, %s146
      %p160 = scmp.eq.s32.totalorder %s46, 3
      %p161 = por %p159, %p160
      %p163 = scmp.ne.s32.totalorder %s146, %s162
      %p164 = scmp.eq.s32.totalorder %s46, 0
      %p165 = por %p163, %p164
      %s166 = ssub.s32 %s47, %s59
      %p167 = scmp.eq.s32.totalorder %s166, 0
      %s169 = sadd.s32 %s168, 1
      %s170 = scalar_select %p167, %s168, %s169
      %p173 = pneg %p167
      %p174 = scmp.eq.s32.totalorder %s40, 3
      %p175 = por %p173, %p174
      %p176 = scmp.ne.s32.totalorder %s168, %s171
      %p177 = scmp.eq.s32.totalorder %s40, 0
      %p178 = por %p176, %p177
      %p179 = scmp.ne.s32.totalorder %s168, %s171
      %p180 = scmp.eq.s32.totalorder %s45, 3
      %p181 = por %p179, %p180
      %p182 = scmp.ne.s32.totalorder %s171, %s172
      %p183 = scmp.eq.s32.totalorder %s45, 0
      %p184 = por %p182, %p183
      %p185 = scmp.ne.s32.totalorder %s171, %s172
      %p186 = scmp.eq.s32.totalorder %s46, 3
      %p187 = por %p185, %p186
      %p189 = scmp.ne.s32.totalorder %s172, %s188
      %p190 = scmp.eq.s32.totalorder %s46, 0
      %p191 = por %p189, %p190
      %s192 = ssub.s32 %s47, %s59
      %p193 = scmp.eq.s32.totalorder %s192, 0
      %s195 = sadd.s32 %s194, 1
      %s196 = scalar_select %p193, %s194, %s195
      %p199 = pneg %p193
      %p200 = scmp.eq.s32.totalorder %s40, 3
      %p201 = por %p199, %p200
      %p202 = scmp.ne.s32.totalorder %s194, %s197
      %p203 = scmp.eq.s32.totalorder %s40, 0
      %p204 = por %p202, %p203
      %p205 = scmp.ne.s32.totalorder %s194, %s197
      %p206 = scmp.eq.s32.totalorder %s45, 3
      %p207 = por %p205, %p206
      %p208 = scmp.ne.s32.totalorder %s197, %s198
      %p209 = scmp.eq.s32.totalorder %s45, 0
      %p210 = por %p208, %p209
      %p211 = scmp.ne.s32.totalorder %s197, %s198
      %p212 = scmp.eq.s32.totalorder %s46, 3
      %p213 = por %p211, %p212
      %p215 = scmp.ne.s32.totalorder %s198, %s214
      %p216 = scmp.eq.s32.totalorder %s46, 0
      %p217 = por %p215, %p216
      %s218 = ssub.s32 %s47, %s59
      %p219 = scmp.eq.s32.totalorder %s218, 0
      %s221 = sadd.s32 %s220, 1
      %s222 = scalar_select %p219, %s220, %s221
      %p225 = pneg %p219
      %p226 = scmp.eq.s32.totalorder %s40, 3
      %p227 = por %p225, %p226
      %p228 = scmp.ne.s32.totalorder %s220, %s223
      %p229 = scmp.eq.s32.totalorder %s40, 0
      %p230 = por %p228, %p229
      %p231 = scmp.ne.s32.totalorder %s220, %s223
      %p232 = scmp.eq.s32.totalorder %s45, 3
      %p233 = por %p231, %p232
      %p234 = scmp.ne.s32.totalorder %s223, %s224
      %p235 = scmp.eq.s32.totalorder %s45, 0
      %p236 = por %p234, %p235
      %p237 = scmp.ne.s32.totalorder %s223, %s224
      %p238 = scmp.eq.s32.totalorder %s46, 3
      %p239 = por %p237, %p238
      %p241 = scmp.ne.s32.totalorder %s224, %s240
      %p242 = scmp.eq.s32.totalorder %s46, 0
      %p243 = por %p241, %p242
      %s244 = ssub.s32 %s47, %s59
      %p245 = scmp.eq.s32.totalorder %s244, 0
      %s247 = sadd.s32 %s246, 1
      %s248 = scalar_select %p245, %s246, %s247
      %p251 = pneg %p245
      %p252 = scmp.eq.s32.totalorder %s40, 3
      %p253 = por %p251, %p252
      %p254 = scmp.ne.s32.totalorder %s246, %s249
      %p255 = scmp.eq.s32.totalorder %s40, 0
      %p256 = por %p254, %p255
      %p257 = scmp.ne.s32.totalorder %s246, %s249
      %p258 = scmp.eq.s32.totalorder %s45, 3
      %p259 = por %p257, %p258
      %p260 = scmp.ne.s32.totalorder %s249, %s250
      %p261 = scmp.eq.s32.totalorder %s45, 0
      %p262 = por %p260, %p261
      %p263 = scmp.ne.s32.totalorder %s249, %s250
      %p264 = scmp.eq.s32.totalorder %s46, 3
      %p265 = por %p263, %p264
      %p267 = scmp.ne.s32.totalorder %s250, %s266
      %p268 = scmp.eq.s32.totalorder %s46, 0
      %p269 = por %p267, %p268
      %s270 = ssub.s32 %s47, %s59
      %p271 = scmp.eq.s32.totalorder %s270, 0
      %s273 = sadd.s32 %s272, 1
      %s274 = scalar_select %p271, %s272, %s273
      %p277 = pneg %p271
      %p278 = scmp.eq.s32.totalorder %s40, 3
      %p279 = por %p277, %p278
      %p280 = scmp.ne.s32.totalorder %s272, %s275
      %p281 = scmp.eq.s32.totalorder %s40, 0
      %p282 = por %p280, %p281
      %p283 = scmp.ne.s32.totalorder %s272, %s275
      %p284 = scmp.eq.s32.totalorder %s45, 3
      %p285 = por %p283, %p284
      %p286 = scmp.ne.s32.totalorder %s275, %s276
      %p287 = scmp.eq.s32.totalorder %s45, 0
      %p288 = por %p286, %p287
      %p289 = scmp.ne.s32.totalorder %s275, %s276
      %p290 = scmp.eq.s32.totalorder %s46, 3
      %p291 = por %p289, %p290
      %p293 = scmp.ne.s32.totalorder %s276, %s292
      %p294 = scmp.eq.s32.totalorder %s46, 0
      %p295 = por %p293, %p294
      %s296 = ssub.s32 %s47, %s59
      %p297 = scmp.eq.s32.totalorder %s296, 0
      %s299 = sadd.s32 %s298, 1
      %s300 = scalar_select %p297, %s298, %s299
      %p303 = pneg %p297
      %p304 = scmp.eq.s32.totalorder %s40, 3
      %p305 = por %p303, %p304
      %p306 = scmp.ne.s32.totalorder %s298, %s301
      %p307 = scmp.eq.s32.totalorder %s40, 0
      %p308 = por %p306, %p307
      %p309 = scmp.ne.s32.totalorder %s298, %s301
      %p310 = scmp.eq.s32.totalorder %s45, 3
      %p311 = por %p309, %p310
      %p312 = scmp.ne.s32.totalorder %s301, %s302
      %p313 = scmp.eq.s32.totalorder %s45, 0
      %p314 = por %p312, %p313
      %p315 = scmp.ne.s32.totalorder %s301, %s302
      %p316 = scmp.eq.s32.totalorder %s46, 3
      %p317 = por %p315, %p316
      %p319 = scmp.ne.s32.totalorder %s302, %s318
      %p320 = scmp.eq.s32.totalorder %s46, 0
      %p321 = por %p319, %p320
      %s322 = ssub.s32 %s47, %s59
      %p323 = scmp.eq.s32.totalorder %s322, 0
      %s325 = sadd.s32 %s324, 1
      %s326 = scalar_select %p323, %s324, %s325
      %p329 = pneg %p323
      %p330 = scmp.eq.s32.totalorder %s40, 3
      %p331 = por %p329, %p330
      %p332 = scmp.ne.s32.totalorder %s324, %s327
      %p333 = scmp.eq.s32.totalorder %s40, 0
      %p334 = por %p332, %p333
      %p335 = scmp.ne.s32.totalorder %s324, %s327
      %p336 = scmp.eq.s32.totalorder %s45, 3
      %p337 = por %p335, %p336
      %p338 = scmp.ne.s32.totalorder %s327, %s328
      %p339 = scmp.eq.s32.totalorder %s45, 0
      %p340 = por %p338, %p339
      %p341 = scmp.ne.s32.totalorder %s327, %s328
      %p342 = scmp.eq.s32.totalorder %s46, 3
      %p343 = por %p341, %p342
      %p345 = scmp.ne.s32.totalorder %s328, %s344
      %p346 = scmp.eq.s32.totalorder %s46, 0
      %p347 = por %p345, %p346
      %s349 = sadd.s32 %s348, 1
      %p352 = scmp.eq.s32.totalorder %s40, 3
      %p353 = scmp.ne.s32.totalorder %s348, %s350
      %p354 = scmp.eq.s32.totalorder %s40, 0
      %p355 = por %p353, %p354
      %p356 = scmp.ne.s32.totalorder %s348, %s350
      %p357 = scmp.eq.s32.totalorder %s45, 3
      %p358 = por %p356, %p357
      %p359 = scmp.ne.s32.totalorder %s350, %s351
      %p360 = scmp.eq.s32.totalorder %s45, 0
      %p361 = por %p359, %p360
      %p362 = scmp.ne.s32.totalorder %s350, %s351
      %p363 = scmp.eq.s32.totalorder %s46, 3
      %p364 = por %p362, %p363
      %p366 = scmp.ne.s32.totalorder %s351, %s365
      %p367 = scmp.eq.s32.totalorder %s46, 0
      %p368 = por %p366, %p367
      %s370 = sadd.s32 %s369, 1
      %p373 = scmp.eq.s32.totalorder %s40, 3
      %p374 = scmp.ne.s32.totalorder %s369, %s371
      %p375 = scmp.eq.s32.totalorder %s40, 0
      %p376 = por %p374, %p375
      %p377 = scmp.ne.s32.totalorder %s369, %s371
      %p378 = scmp.eq.s32.totalorder %s45, 3
      %p379 = por %p377, %p378
      %p380 = scmp.ne.s32.totalorder %s371, %s372
      %p381 = scmp.eq.s32.totalorder %s45, 0
      %p382 = por %p380, %p381
      %p383 = scmp.ne.s32.totalorder %s371, %s372
      %p384 = scmp.eq.s32.totalorder %s46, 3
      %p385 = por %p383, %p384
      %p387 = scmp.ne.s32.totalorder %s372, %s386
      %p388 = scmp.eq.s32.totalorder %s46, 0
      %p389 = por %p387, %p388
      %s390 = ssub.s32 %s47, %s59
      %s391 = ssub.s32 %s48, %s55
      %s392 = sor.u32 %s390, %s391
      %p393 = scmp.eq.s32.totalorder %s392, 0
      %s395 = sadd.s32 %s394, 1
      %s396 = scalar_select %p393, %s394, %s395
      %p399 = pneg %p393
      %p400 = scmp.eq.s32.totalorder %s40, 3
      %p401 = por %p399, %p400
      %p402 = scmp.ne.s32.totalorder %s394, %s397
      %p403 = scmp.eq.s32.totalorder %s40, 0
      %p404 = por %p402, %p403
      %p405 = scmp.ne.s32.totalorder %s394, %s397
      %p406 = scmp.eq.s32.totalorder %s45, 3
      %p407 = por %p405, %p406
      %p408 = scmp.ne.s32.totalorder %s397, %s398
      %p409 = scmp.eq.s32.totalorder %s45, 0
      %p410 = por %p408, %p409
      %p411 = scmp.ne.s32.totalorder %s397, %s398
      %p412 = scmp.eq.s32.totalorder %s46, 3
      %p413 = por %p411, %p412
      %p415 = scmp.ne.s32.totalorder %s398, %s414
      %p416 = scmp.eq.s32.totalorder %s46, 0
      %p417 = por %p415, %p416
      %p418 = scmp.le.s32.totalorder 1, %s40
      %p419 = scmp.lt.s32.totalorder %s40, 5
      %p420 = pnand %p418, %p419
      %p421 = pneg %p420
      // Predicated region
      $region9: #{tpu_custom_call.1} parent=5 // pred_check
        _
      $region10: #{tpu_custom_call.1} parent=5 // pred_check_branch
        %423 = sbr.rel (%p420) target = $region12
      $region11: #{tpu_custom_call.1} parent=5 // pred_region
        %s424 = ssub.s32 %s40, 1
        // Predicated region
        $region13: #{tpu_custom_call.1} parent=11 // pred_check
          %p425 = pneg %p361
        $region14: #{tpu_custom_call.1} parent=11 // pred_check_branch
          %427 = sbr.rel (%p425) target = $region16
        $region15: #{tpu_custom_call.1} parent=11 // pred_region
          _
        $region16: #{tpu_custom_call.1} parent=11 // pred_fallthru
          _
        // Predicated region
        $region17: #{tpu_custom_call.1} parent=11 // pred_check
          %p428 = pneg %p382
        $region18: #{tpu_custom_call.1} parent=11 // pred_check_branch
          %430 = sbr.rel (%p428) target = $region20
        $region19: #{tpu_custom_call.1} parent=11 // pred_region
          _
        $region20: #{tpu_custom_call.1} parent=11 // pred_fallthru
          _
      $region12: #{tpu_custom_call.1} parent=5 // pred_fallthru
        _
      %p431 = scmp.lt.s32.totalorder %s40, 4
      // Predicated region
      $region21: #{tpu_custom_call.1} parent=5 // pred_check
        %p432 = pneg %p431
      $region22: #{tpu_custom_call.1} parent=5 // pred_check_branch
        %434 = sbr.rel (%p432) target = $region24
      $region23: #{tpu_custom_call.1} parent=5 // pred_region
        // Predicated region
        $region25: #{tpu_custom_call.1} parent=23 // pred_check
          %p435 = pneg %p74
        $region26: #{tpu_custom_call.1} parent=23 // pred_check_branch
          %437 = sbr.rel (%p435) target = $region28
        $region27: #{tpu_custom_call.1} parent=23 // pred_region
          %s438 = sand.u32 %s64, 1
          %s439 = scalar_lea.sflag [#allocation3], %s438
          %s440 = sand.u32 %s64, 1
          %s441 = smul.addr %s440, 16
          %s442 = scalar_lea.vmem [#allocation2], %s441
          %s443 = smul.u32 2, %s48
          %445 = vsyncadd %s439, 0
          %s446 = smul.addr %s47, 2
          %s447 = sadd.s32 %s443, %s446
          %s448 = smul.addr %s447, 8
          %s449 = scalar_lea.hbm %s0, %s448
          %s450 = sshll.u32 %s449, 4
          %s451 = int_to_ptr.hbm [resolvable:$true] %s450
          %s452 = sshll.u32 %s442, 4
          %s453 = int_to_ptr.vmem [resolvable:$true] %s452
          %458 = dma.hbm_to_vmem [thread:$0]  %s451, 256, %s453, %s439, 128, 128, 8
        $region28: #{tpu_custom_call.1} parent=23 // pred_fallthru
          _
        // Predicated region
        $region29: #{tpu_custom_call.1} parent=23 // pred_check
          %p459 = pneg %p100
        $region30: #{tpu_custom_call.1} parent=23 // pred_check_branch
          %461 = sbr.rel (%p459) target = $region32
        $region31: #{tpu_custom_call.1} parent=23 // pred_region
          %s462 = sand.u32 %s40, 1
          %s463 = scalar_lea.sflag [#allocation6], %s462
          %s464 = sand.u32 %s90, 1
          %s465 = smul.addr %s464, 128
          %s466 = scalar_lea.vmem [#allocation5], %s465
          %468 = vsyncadd %s463, 0
          %s469 = smul.addr %s47, 16
          %s470 = smul.addr %s469, 8
          %s471 = scalar_lea.hbm %s1, %s470
          %s472 = sshll.u32 %s471, 4
          %s473 = int_to_ptr.hbm [resolvable:$true] %s472
          %s474 = sshll.u32 %s466, 4
          %s475 = int_to_ptr.vmem [resolvable:$true] %s474
          %480 = dma.hbm_to_vmem [thread:$0]  %s473, 2048, %s475, %s463, 128, 128, 8
        $region32: #{tpu_custom_call.1} parent=23 // pred_fallthru
          _
        // Predicated region
        $region33: #{tpu_custom_call.1} parent=23 // pred_check
          %p481 = pneg %p126
        $region34: #{tpu_custom_call.1} parent=23 // pred_check_branch
          %483 = sbr.rel (%p481) target = $region36
        $region35: #{tpu_custom_call.1} parent=23 // pred_region
          %s484 = sand.u32 %s40, 1
          %s485 = scalar_lea.sflag [#allocation6], %s484
          %s486 = sand.u32 %s116, 1
          %s487 = scalar_lea.vmem [#allocation7], %s486
          %489 = vsyncadd %s485, 0
          %s490 = scalar_lea.hbm %s2, %s47
          %s492 = sshll.u32 %s490, 4
          %s493 = int_to_ptr.hbm [resolvable:$true] %s492
          %s494 = sshll.u32 %s487, 4
          %s495 = int_to_ptr.vmem [resolvable:$true] %s494
          %497 = dma.hbm_to_vmem [thread:$0]  %s493, 16, %s495, %s485
        $region36: #{tpu_custom_call.1} parent=23 // pred_fallthru
          _
        // Predicated region
        $region37: #{tpu_custom_call.1} parent=23 // pred_check
          %p498 = pneg %p152
        $region38: #{tpu_custom_call.1} parent=23 // pred_check_branch
          %500 = sbr.rel (%p498) target = $region40
        $region39: #{tpu_custom_call.1} parent=23 // pred_region
          %s501 = sand.u32 %s40, 1
          %s502 = scalar_lea.sflag [#allocation9], %s501
          %s503 = sand.u32 %s142, 1
          %s504 = smul.addr %s503, 128
          %s505 = scalar_lea.vmem [#allocation8], %s504
          %507 = vsyncadd %s502, 0
          %s508 = smul.addr %s47, 16
          %s509 = smul.addr %s508, 8
          %s510 = scalar_lea.hbm %s3, %s509
          %s511 = sshll.u32 %s510, 4
          %s512 = int_to_ptr.hbm [resolvable:$true] %s511
          %s513 = sshll.u32 %s505, 4
          %s514 = int_to_ptr.vmem [resolvable:$true] %s513
          %519 = dma.hbm_to_vmem [thread:$0]  %s512, 2048, %s514, %s502, 128, 128, 8
        $region40: #{tpu_custom_call.1} parent=23 // pred_fallthru
          _
        // Predicated region
        $region41: #{tpu_custom_call.1} parent=23 // pred_check
          %p520 = pneg %p178
        $region42: #{tpu_custom_call.1} parent=23 // pred_check_branch
          %522 = sbr.rel (%p520) target = $region44
        $region43: #{tpu_custom_call.1} parent=23 // pred_region
          %s523 = sand.u32 %s40, 1
          %s524 = scalar_lea.sflag [#allocation9], %s523
          %s525 = sand.u32 %s168, 1
          %s526 = scalar_lea.vmem [#allocation10], %s525
          %528 = vsyncadd %s524, 0
          %s529 = scalar_lea.hbm %s4, %s47
          %s531 = sshll.u32 %s529, 4
          %s532 = int_to_ptr.hbm [resolvable:$true] %s531
          %s533 = sshll.u32 %s526, 4
          %s534 = int_to_ptr.vmem [resolvable:$true] %s533
          %536 = dma.hbm_to_vmem [thread:$0]  %s532, 16, %s534, %s524
        $region44: #{tpu_custom_call.1} parent=23 // pred_fallthru
          _
        // Predicated region
        $region45: #{tpu_custom_call.1} parent=23 // pred_check
          %p537 = pneg %p204
        $region46: #{tpu_custom_call.1} parent=23 // pred_check_branch
          %539 = sbr.rel (%p537) target = $region48
        $region47: #{tpu_custom_call.1} parent=23 // pred_region
          %s540 = sand.u32 %s40, 1
          %s541 = scalar_lea.sflag [#allocation12], %s540
          %s542 = sand.u32 %s194, 1
          %s543 = smul.addr %s542, 128
          %s544 = scalar_lea.vmem [#allocation11], %s543
          %546 = vsyncadd %s541, 0
          %s547 = smul.addr %s47, 16
          %s548 = smul.addr %s547, 8
          %s549 = scalar_lea.hbm %s5, %s548
          %s550 = sshll.u32 %s549, 4
          %s551 = int_to_ptr.hbm [resolvable:$true] %s550
          %s552 = sshll.u32 %s544, 4
          %s553 = int_to_ptr.vmem [resolvable:$true] %s552
          %558 = dma.hbm_to_vmem [thread:$0]  %s551, 2048, %s553, %s541, 128, 128, 8
        $region48: #{tpu_custom_call.1} parent=23 // pred_fallthru
          _
        // Predicated region
        $region49: #{tpu_custom_call.1} parent=23 // pred_check
          %p559 = pneg %p230
        $region50: #{tpu_custom_call.1} parent=23 // pred_check_branch
          %561 = sbr.rel (%p559) target = $region52
        $region51: #{tpu_custom_call.1} parent=23 // pred_region
          %p562 = scmp.lt.s32.totalorder %s47, 3
          %s563 = scalar_select %p562, %s47, 3
          %s564 = scalar_lea.vmem %s6, %s563
        $region52: #{tpu_custom_call.1} parent=23 // pred_fallthru
          _
        // Predicated region
        $region53: #{tpu_custom_call.1} parent=23 // pred_check
          %p565 = pneg %p256
        $region54: #{tpu_custom_call.1} parent=23 // pred_check_branch
          %567 = sbr.rel (%p565) target = $region56
        $region55: #{tpu_custom_call.1} parent=23 // pred_region
          %s568 = sand.u32 %s40, 1
          %s569 = scalar_lea.sflag [#allocation12], %s568
          %s570 = sand.u32 %s246, 1
          %s571 = smul.addr %s570, 128
          %s572 = scalar_lea.vmem [#allocation13], %s571
          %574 = vsyncadd %s569, 0
          %s575 = smul.addr %s47, 16
          %s576 = smul.addr %s575, 8
          %s577 = scalar_lea.hbm %s7, %s576
          %s578 = sshll.u32 %s577, 4
          %s579 = int_to_ptr.hbm [resolvable:$true] %s578
          %s580 = sshll.u32 %s572, 4
          %s581 = int_to_ptr.vmem [resolvable:$true] %s580
          %586 = dma.hbm_to_vmem [thread:$0]  %s579, 2048, %s581, %s569, 128, 128, 8
        $region56: #{tpu_custom_call.1} parent=23 // pred_fallthru
          _
        // Predicated region
        $region57: #{tpu_custom_call.1} parent=23 // pred_check
          %p587 = pneg %p282
        $region58: #{tpu_custom_call.1} parent=23 // pred_check_branch
          %589 = sbr.rel (%p587) target = $region60
        $region59: #{tpu_custom_call.1} parent=23 // pred_region
          %s590 = sand.u32 %s40, 1
          %s591 = scalar_lea.sflag [#allocation15], %s590
          %s592 = sand.u32 %s272, 1
          %s593 = scalar_lea.vmem [#allocation14], %s592
          %595 = vsyncadd %s591, 0
          %s596 = scalar_lea.hbm %s8, %s47
          %s598 = sshll.u32 %s596, 4
          %s599 = int_to_ptr.hbm [resolvable:$true] %s598
          %s600 = sshll.u32 %s593, 4
          %s601 = int_to_ptr.vmem [resolvable:$true] %s600
          %603 = dma.hbm_to_vmem [thread:$0]  %s599, 16, %s601, %s591
        $region60: #{tpu_custom_call.1} parent=23 // pred_fallthru
          _
        // Predicated region
        $region61: #{tpu_custom_call.1} parent=23 // pred_check
          %p604 = pneg %p308
        $region62: #{tpu_custom_call.1} parent=23 // pred_check_branch
          %606 = sbr.rel (%p604) target = $region64
        $region63: #{tpu_custom_call.1} parent=23 // pred_region
          %s607 = sand.u32 %s40, 1
          %s608 = scalar_lea.sflag [#allocation15], %s607
          %s609 = sand.u32 %s298, 1
          %s610 = smul.addr %s609, 512
          %s611 = scalar_lea.vmem [#allocation16], %s610
          %613 = vsyncadd %s608, 0
          %s614 = smul.addr %s47, 64
          %s615 = smul.addr %s614, 8
          %s616 = scalar_lea.hbm %s9, %s615
          %s617 = sshll.u32 %s616, 4
          %s618 = int_to_ptr.hbm [resolvable:$true] %s617
          %s619 = sshll.u32 %s611, 4
          %s620 = int_to_ptr.vmem [resolvable:$true] %s619
          %625 = dma.hbm_to_vmem [thread:$0]  %s618, 8192, %s620, %s608, 512, 512, 32
        $region64: #{tpu_custom_call.1} parent=23 // pred_fallthru
          _
        // Predicated region
        $region65: #{tpu_custom_call.1} parent=23 // pred_check
          %p626 = pneg %p334
        $region66: #{tpu_custom_call.1} parent=23 // pred_check_branch
          %628 = sbr.rel (%p626) target = $region68
        $region67: #{tpu_custom_call.1} parent=23 // pred_region
          %s629 = sand.u32 %s324, 1
          %s630 = scalar_lea.sflag [#allocation18], %s629
          %s631 = sand.u32 %s324, 1
          %s632 = smul.addr %s631, 4
          %s633 = scalar_lea.vmem [#allocation17], %s632
          %635 = vsyncadd %s630, 0
          %s636 = smul.addr %s47, 4
          %s637 = scalar_lea.hbm %s10, %s636
          %s639 = sshll.u32 %s637, 4
          %s640 = int_to_ptr.hbm [resolvable:$true] %s639
          %s641 = sshll.u32 %s633, 4
          %s642 = int_to_ptr.vmem [resolvable:$true] %s641
          %644 = dma.hbm_to_vmem [thread:$0]  %s640, 64, %s642, %s630
        $region68: #{tpu_custom_call.1} parent=23 // pred_fallthru
          _
      $region24: #{tpu_custom_call.1} parent=5 // pred_fallthru
        _
      %p645 = scmp.le.s32.totalorder 1, %s40
      %p646 = scmp.lt.s32.totalorder %s40, 5
      %p647 = pnand %p645, %p646
      %p648 = pneg %p647
      // Predicated region
      $region69: #{tpu_custom_call.1} parent=5 // pred_check
        _
      $region70: #{tpu_custom_call.1} parent=5 // pred_check_branch
        %650 = sbr.rel (%p647) target = $region72
      $region71: #{tpu_custom_call.1} parent=5 // pred_region
        %s651 = ssub.s32 %s40, 1
        %s652 = sand.u32 %s67, 1
        %s653 = scalar_lea.sflag [#allocation3], %s652
        %s654 = sand.u32 %s67, 1
        %s655 = smul.addr %s654, 16
        %s656 = scalar_lea.vmem [#allocation2], %s655
        // Predicated region
        $region73: #{tpu_custom_call.1} parent=71 // pred_check
          %p657 = pneg %p80
        $region74: #{tpu_custom_call.1} parent=71 // pred_check_branch
          %659 = sbr.rel (%p657) target = $region76
        $region75: #{tpu_custom_call.1} parent=71 // pred_region
          %661 = dma.done %s653, 256
        $region76: #{tpu_custom_call.1} parent=71 // pred_fallthru
          _
        %s662 = sand.u32 %s45, 1
        %s663 = scalar_lea.sflag [#allocation6], %s662
        %s664 = sand.u32 %s93, 1
        %s665 = smul.addr %s664, 128
        %s666 = scalar_lea.vmem [#allocation5], %s665
        // Predicated region
        $region77: #{tpu_custom_call.1} parent=71 // pred_check
          %p667 = pneg %p106
        $region78: #{tpu_custom_call.1} parent=71 // pred_check_branch
          %669 = sbr.rel (%p667) target = $region80
        $region79: #{tpu_custom_call.1} parent=71 // pred_region
          %671 = dma.done %s663, 2048
        $region80: #{tpu_custom_call.1} parent=71 // pred_fallthru
          _
        %s672 = sand.u32 %s45, 1
        %s673 = scalar_lea.sflag [#allocation6], %s672
        %s674 = sand.u32 %s119, 1
        %s675 = scalar_lea.vmem [#allocation7], %s674
        // Predicated region
        $region81: #{tpu_custom_call.1} parent=71 // pred_check
          %p676 = pneg %p132
        $region82: #{tpu_custom_call.1} parent=71 // pred_check_branch
          %678 = sbr.rel (%p676) target = $region84
        $region83: #{tpu_custom_call.1} parent=71 // pred_region
          %680 = dma.done %s673, 16
        $region84: #{tpu_custom_call.1} parent=71 // pred_fallthru
          _
        %s681 = sand.u32 %s45, 1
        %s682 = scalar_lea.sflag [#allocation9], %s681
        %s683 = sand.u32 %s145, 1
        %s684 = smul.addr %s683, 128
        %s685 = scalar_lea.vmem [#allocation8], %s684
        // Predicated region
        $region85: #{tpu_custom_call.1} parent=71 // pred_check
          %p686 = pneg %p158
        $region86: #{tpu_custom_call.1} parent=71 // pred_check_branch
          %688 = sbr.rel (%p686) target = $region88
        $region87: #{tpu_custom_call.1} parent=71 // pred_region
          %690 = dma.done %s682, 2048
        $region88: #{tpu_custom_call.1} parent=71 // pred_fallthru
          _
        %s691 = sand.u32 %s45, 1
        %s692 = scalar_lea.sflag [#allocation9], %s691
        %s693 = sand.u32 %s171, 1
        %s694 = scalar_lea.vmem [#allocation10], %s693
        // Predicated region
        $region89: #{tpu_custom_call.1} parent=71 // pred_check
          %p695 = pneg %p184
        $region90: #{tpu_custom_call.1} parent=71 // pred_check_branch
          %697 = sbr.rel (%p695) target = $region92
        $region91: #{tpu_custom_call.1} parent=71 // pred_region
          %699 = dma.done %s692, 16
        $region92: #{tpu_custom_call.1} parent=71 // pred_fallthru
          _
        %s700 = sand.u32 %s45, 1
        %s701 = scalar_lea.sflag [#allocation12], %s700
        %s702 = sand.u32 %s197, 1
        %s703 = smul.addr %s702, 128
        %s704 = scalar_lea.vmem [#allocation11], %s703
        // Predicated region
        $region93: #{tpu_custom_call.1} parent=71 // pred_check
          %p705 = pneg %p210
        $region94: #{tpu_custom_call.1} parent=71 // pred_check_branch
          %707 = sbr.rel (%p705) target = $region96
        $region95: #{tpu_custom_call.1} parent=71 // pred_region
          %709 = dma.done %s701, 2048
        $region96: #{tpu_custom_call.1} parent=71 // pred_fallthru
          _
        %s710 = sand.u32 %s45, 1
        %s711 = scalar_lea.sflag [#allocation12], %s710
        %s712 = sand.u32 %s249, 1
        %s713 = smul.addr %s712, 128
        %s714 = scalar_lea.vmem [#allocation13], %s713
        // Predicated region
        $region97: #{tpu_custom_call.1} parent=71 // pred_check
          %p715 = pneg %p262
        $region98: #{tpu_custom_call.1} parent=71 // pred_check_branch
          %717 = sbr.rel (%p715) target = $region100
        $region99: #{tpu_custom_call.1} parent=71 // pred_region
          %719 = dma.done %s711, 2048
        $region100: #{tpu_custom_call.1} parent=71 // pred_fallthru
          _
        %s720 = sand.u32 %s45, 1
        %s721 = scalar_lea.sflag [#allocation15], %s720
        %s722 = sand.u32 %s275, 1
        %s723 = scalar_lea.vmem [#allocation14], %s722
        // Predicated region
        $region101: #{tpu_custom_call.1} parent=71 // pred_check
          %p724 = pneg %p288
        $region102: #{tpu_custom_call.1} parent=71 // pred_check_branch
          %726 = sbr.rel (%p724) target = $region104
        $region103: #{tpu_custom_call.1} parent=71 // pred_region
          %728 = dma.done %s721, 16
        $region104: #{tpu_custom_call.1} parent=71 // pred_fallthru
          _
        %s729 = sand.u32 %s45, 1
        %s730 = scalar_lea.sflag [#allocation15], %s729
        %s731 = sand.u32 %s301, 1
        %s732 = smul.addr %s731, 512
        %s733 = scalar_lea.vmem [#allocation16], %s732
        // Predicated region
        $region105: #{tpu_custom_call.1} parent=71 // pred_check
          %p734 = pneg %p314
        $region106: #{tpu_custom_call.1} parent=71 // pred_check_branch
          %736 = sbr.rel (%p734) target = $region108
        $region107: #{tpu_custom_call.1} parent=71 // pred_region
          %738 = dma.done %s730, 8192
        $region108: #{tpu_custom_call.1} parent=71 // pred_fallthru
          _
        %s739 = sand.u32 %s327, 1
        %s740 = scalar_lea.sflag [#allocation18], %s739
        %s741 = sand.u32 %s327, 1
        %s742 = smul.addr %s741, 4
        %s743 = scalar_lea.vmem [#allocation17], %s742
        // Predicated region
        $region109: #{tpu_custom_call.1} parent=71 // pred_check
          %p744 = pneg %p340
        $region110: #{tpu_custom_call.1} parent=71 // pred_check_branch
          %746 = sbr.rel (%p744) target = $region112
        $region111: #{tpu_custom_call.1} parent=71 // pred_region
          %748 = dma.done %s740, 64
        $region112: #{tpu_custom_call.1} parent=71 // pred_fallthru
          _
        %s749 = sand.u32 %s67, 1
        %s750 = scalar_lea.sflag [#allocation3], %s749
        %s751 = sand.u32 %s67, 1
        %s752 = smul.addr %s751, 16
        %s753 = scalar_lea.vmem [#allocation2], %s752
        %p754 = pneg %p80
        %p755 = pneg %p77
        %s756 = sand.u32 %s45, 1
        %s757 = scalar_lea.sflag [#allocation6], %s756
        %s758 = sand.u32 %s93, 1
        %s759 = smul.addr %s758, 128
        %s760 = scalar_lea.vmem [#allocation5], %s759
        %p761 = pneg %p106
        %p762 = pneg %p103
        %s763 = sand.u32 %s45, 1
        %s764 = scalar_lea.sflag [#allocation6], %s763
        %s765 = sand.u32 %s119, 1
        %s766 = scalar_lea.vmem [#allocation7], %s765
        %p767 = pneg %p132
        %p768 = pneg %p129
        %s769 = sand.u32 %s45, 1
        %s770 = scalar_lea.sflag [#allocation9], %s769
        %s771 = sand.u32 %s145, 1
        %s772 = smul.addr %s771, 128
        %s773 = scalar_lea.vmem [#allocation8], %s772
        %p774 = pneg %p158
        %p775 = pneg %p155
        %s776 = sand.u32 %s45, 1
        %s777 = scalar_lea.sflag [#allocation9], %s776
        %s778 = sand.u32 %s171, 1
        %s779 = scalar_lea.vmem [#allocation10], %s778
        %p780 = pneg %p184
        %p781 = pneg %p181
        %s782 = sand.u32 %s45, 1
        %s783 = scalar_lea.sflag [#allocation12], %s782
        %s784 = sand.u32 %s197, 1
        %s785 = smul.addr %s784, 128
        %s786 = scalar_lea.vmem [#allocation11], %s785
        %p787 = pneg %p210
        %p788 = pneg %p207
        %p789 = scmp.lt.s32.totalorder %s49, 3
        %s790 = scalar_select %p789, %s49, 3
        %s791 = scalar_lea.vmem %s6, %s790
        %p792 = pneg %p236
        %p793 = pneg %p233
        %s794 = sand.u32 %s45, 1
        %s795 = scalar_lea.sflag [#allocation12], %s794
        %s796 = sand.u32 %s249, 1
        %s797 = smul.addr %s796, 128
        %s798 = scalar_lea.vmem [#allocation13], %s797
        %p799 = pneg %p262
        %p800 = pneg %p259
        %s801 = sand.u32 %s45, 1
        %s802 = scalar_lea.sflag [#allocation15], %s801
        %s803 = sand.u32 %s275, 1
        %s804 = scalar_lea.vmem [#allocation14], %s803
        %p805 = pneg %p288
        %p806 = pneg %p285
        %s807 = sand.u32 %s45, 1
        %s808 = scalar_lea.sflag [#allocation15], %s807
        %s809 = sand.u32 %s301, 1
        %s810 = smul.addr %s809, 512
        %s811 = scalar_lea.vmem [#allocation16], %s810
        %p812 = pneg %p314
        %p813 = pneg %p311
        %s814 = sand.u32 %s327, 1
        %s815 = scalar_lea.sflag [#allocation18], %s814
        %s816 = sand.u32 %s327, 1
        %s817 = smul.addr %s816, 4
        %s818 = scalar_lea.vmem [#allocation17], %s817
        %p819 = pneg %p340
        %p820 = pneg %p337
        %p821 = pneg %p361
        %p822 = pneg %p358
        %p823 = pneg %p382
        %p824 = pneg %p379
        %p825 = pneg %p410
        %p826 = pneg %p407
        %s827 = sand.u32 %s397, 1
        %s828 = scalar_lea.sflag [#allocation4], %s827
        %s829 = sand.u32 %s397, 1
        %s830 = smul.addr %s829, 96
        %s831 = scalar_lea.vmem [#allocation19], %s830
        %s832 = smul.u32 2, %s50
        %p833 = scmp.lt.s32.totalorder %s49, 3
        %s834 = scalar_select %p833, %s49, 3
        %s835 = scalar_lea.vmem %s6, %s834
        %s836 = smul.u32 2, %s50
        %v837 = vld [vmem:[%s656] sm:$0xff]
        %v838 = vld [vmem:[%s656 + $0x8] sm:$0xff]
        %v839 = vld [vmem:[%s666] sm:$0xff]
        %v840 = vld [vmem:[%s666 + $0x8] sm:$0xff]
        %v841 = vld [vmem:[%s666 + $0x10] sm:$0xff]
        %v842 = vld [vmem:[%s666 + $0x18] sm:$0xff]
        %v843 = vld [vmem:[%s666 + $0x20] sm:$0xff]
        %v844 = vld [vmem:[%s666 + $0x28] sm:$0xff]
        %v845 = vld [vmem:[%s666 + $0x30] sm:$0xff]
        %v846 = vld [vmem:[%s666 + $0x38] sm:$0xff]
        %v847 = vld [vmem:[%s666 + $0x40] sm:$0xff]
        %v848 = vld [vmem:[%s666 + $0x48] sm:$0xff]
        %v849 = vld [vmem:[%s666 + $0x50] sm:$0xff]
        %v850 = vld [vmem:[%s666 + $0x58] sm:$0xff]
        %v851 = vld [vmem:[%s666 + $0x60] sm:$0xff]
        %v852 = vld [vmem:[%s666 + $0x68] sm:$0xff]
        %v853 = vld [vmem:[%s666 + $0x70] sm:$0xff]
        %v854 = vld [vmem:[%s666 + $0x78] sm:$0xff]
        %v855 = vld [vmem:[%s675] sm:$0x1]
        %v857 = vperm.slane %v855, 0
        %859 = vmatpush.msra.mxu0 %v854
        %860 = vmatpush.msra.mxu0 %v853
        %861 = vmatpush.msra.mxu0 %v852
        %862 = vmatpush.msra.mxu0 %v851
        %863 = vmatpush.msra.mxu0 %v850
        %864 = vmatpush.msra.mxu0 %v849
        %865 = vmatpush.msra.mxu0 %v848
        %866 = vmatpush.msra.mxu0 %v847
        %867 = vmatpush.msra.mxu0 %v846
        %868 = vmatpush.msra.mxu0 %v845
        %869 = vmatpush.msra.mxu0 %v844
        %870 = vmatpush.msra.mxu0 %v843
        %871 = vmatpush.msra.mxu0 %v842
        %872 = vmatpush.msra.mxu0 %v841
        %873 = vmatpush.msra.mxu0 %v840
        %874 = vmatpush.msra.mxu0 %v839
        %875 = vmatmul.f32.gmra.mxu0 %v837
        %v876 = vpop.f32.mrf.mxu0
        %v877 = vadd.f32 %v857, %v876
        %878 = vmatmul.f32.gmra.mxu0 %v838
        %v879 = vpop.f32.mrf.mxu0
        %v880 = vadd.f32 %v857, %v879
        %881 = vdwg.mxu0
        %v882 = vxor.u32 %v877, 2147483648
        %v883 = vxor.u32 %v880, 2147483648
        %v884 = vmul.f32 %v882, 1.442695
        %v885 = vpow.pop %v884
        %v886 = vmul.f32 %v883, 1.442695
        %v887 = vpow.pop %v886
        %v888 = vadd.f32 %v885, 1.0
        %v889 = vadd.f32 %v887, 1.0
        %v890 = vrcp.pop %v888
        %v891 = vmul.f32 %v888, %v890
        %v892 = vsub.f32 1.0, %v891
        %v893 = vmul.f32 %v890, %v892
        %v894 = vadd.f32 %v890, %v893
        %vm895 = vweird.f32 %v888
        %vm896 = vweird.f32 %v890
        %vm897 = vmor %vm895, %vm896
        %v898 = vsel %vm897, %v890, %v894
        %v899 = vand.u32 2147483647, %v888
        %vm900 = vcmp.eq.f32.partialorder %v899, 8.507059e+37
        %v901 = vand.u32 %v888, 2147483648
        %v902 = vor.u32 1.1754944e-38, %v901
        %v903 = vsel %vm900, %v902, %v898
        %v904 = vmul.f32 1.0, %v903
        %v905 = vrcp.pop %v889
        %v906 = vmul.f32 %v889, %v905
        %v907 = vsub.f32 1.0, %v906
        %v908 = vmul.f32 %v905, %v907
        %v909 = vadd.f32 %v905, %v908
        %vm910 = vweird.f32 %v889
        %vm911 = vweird.f32 %v905
        %vm912 = vmor %vm910, %vm911
        %v913 = vsel %vm912, %v905, %v909
        %v914 = vand.u32 2147483647, %v889
        %vm915 = vcmp.eq.f32.partialorder %v914, 8.507059e+37
        %v916 = vand.u32 %v889, 2147483648
        %v917 = vor.u32 1.1754944e-38, %v916
        %v918 = vsel %vm915, %v917, %v913
        %v919 = vmul.f32 1.0, %v918
        %v920 = vmul.f32 %v877, %v904
        %v921 = vmul.f32 %v880, %v919
        %v922 = vld [vmem:[%s685] sm:$0xff]
        %v923 = vld [vmem:[%s685 + $0x8] sm:$0xff]
        %v924 = vld [vmem:[%s685 + $0x10] sm:$0xff]
        %v925 = vld [vmem:[%s685 + $0x18] sm:$0xff]
        %v926 = vld [vmem:[%s685 + $0x20] sm:$0xff]
        %v927 = vld [vmem:[%s685 + $0x28] sm:$0xff]
        %v928 = vld [vmem:[%s685 + $0x30] sm:$0xff]
        %v929 = vld [vmem:[%s685 + $0x38] sm:$0xff]
        %v930 = vld [vmem:[%s685 + $0x40] sm:$0xff]
        %v931 = vld [vmem:[%s685 + $0x48] sm:$0xff]
        %v932 = vld [vmem:[%s685 + $0x50] sm:$0xff]
        %v933 = vld [vmem:[%s685 + $0x58] sm:$0xff]
        %v934 = vld [vmem:[%s685 + $0x60] sm:$0xff]
        %v935 = vld [vmem:[%s685 + $0x68] sm:$0xff]
        %v936 = vld [vmem:[%s685 + $0x70] sm:$0xff]
        %v937 = vld [vmem:[%s685 + $0x78] sm:$0xff]
        %v938 = vld [vmem:[%s694] sm:$0x1]
        %v940 = vperm.slane %v938, 0
        %942 = vmatpush.msra.mxu0 %v937
        %943 = vmatpush.msra.mxu0 %v936
        %944 = vmatpush.msra.mxu0 %v935
        %945 = vmatpush.msra.mxu0 %v934
        %946 = vmatpush.msra.mxu0 %v933
        %947 = vmatpush.msra.mxu0 %v932
        %948 = vmatpush.msra.mxu0 %v931
        %949 = vmatpush.msra.mxu0 %v930
        %950 = vmatpush.msra.mxu0 %v929
        %951 = vmatpush.msra.mxu0 %v928
        %952 = vmatpush.msra.mxu0 %v927
        %953 = vmatpush.msra.mxu0 %v926
        %954 = vmatpush.msra.mxu0 %v925
        %955 = vmatpush.msra.mxu0 %v924
        %956 = vmatpush.msra.mxu0 %v923
        %957 = vmatpush.msra.mxu0 %v922
        %958 = vmatmul.f32.gmra.mxu0 %v920
        %v959 = vpop.f32.mrf.mxu0
        %v960 = vadd.f32 %v940, %v959
        %961 = vmatmul.f32.gmra.mxu0 %v921
        %v962 = vpop.f32.mrf.mxu0
        %v963 = vadd.f32 %v940, %v962
        %964 = vdwg.mxu0
        %v965 = vxor.u32 %v960, 2147483648
        %v966 = vxor.u32 %v963, 2147483648
        %v967 = vmul.f32 %v965, 1.442695
        %v968 = vpow.pop %v967
        %v969 = vmul.f32 %v966, 1.442695
        %v970 = vpow.pop %v969
        %v971 = vadd.f32 %v968, 1.0
        %v972 = vadd.f32 %v970, 1.0
        %v973 = vrcp.pop %v971
        %v974 = vmul.f32 %v971, %v973
        %v975 = vsub.f32 1.0, %v974
        %v976 = vmul.f32 %v973, %v975
        %v977 = vadd.f32 %v973, %v976
        %vm978 = vweird.f32 %v971
        %vm979 = vweird.f32 %v973
        %vm980 = vmor %vm978, %vm979
        %v981 = vsel %vm980, %v973, %v977
        %v982 = vand.u32 2147483647, %v971
        %vm983 = vcmp.eq.f32.partialorder %v982, 8.507059e+37
        %v984 = vand.u32 %v971, 2147483648
        %v985 = vor.u32 1.1754944e-38, %v984
        %v986 = vsel %vm983, %v985, %v981
        %v987 = vmul.f32 1.0, %v986
        %v988 = vrcp.pop %v972
        %v989 = vmul.f32 %v972, %v988
        %v990 = vsub.f32 1.0, %v989
        %v991 = vmul.f32 %v988, %v990
        %v992 = vadd.f32 %v988, %v991
        %vm993 = vweird.f32 %v972
        %vm994 = vweird.f32 %v988
        %vm995 = vmor %vm993, %vm994
        %v996 = vsel %vm995, %v988, %v992
        %v997 = vand.u32 2147483647, %v972
        %vm998 = vcmp.eq.f32.partialorder %v997, 8.507059e+37
        %v999 = vand.u32 %v972, 2147483648
        %v1000 = vor.u32 1.1754944e-38, %v999
        %v1001 = vsel %vm998, %v1000, %v996
        %v1002 = vmul.f32 1.0, %v1001
        %v1003 = vmul.f32 %v960, %v987
        %v1004 = vmul.f32 %v963, %v1002
        %v1005 = vld [vmem:[%s704] sm:$0xff]
        %v1006 = vld [vmem:[%s704 + $0x8] sm:$0xff]
        %v1007 = vld [vmem:[%s704 + $0x10] sm:$0xff]
        %v1008 = vld [vmem:[%s704 + $0x18] sm:$0xff]
        %v1009 = vld [vmem:[%s704 + $0x20] sm:$0xff]
        %v1010 = vld [vmem:[%s704 + $0x28] sm:$0xff]
        %v1011 = vld [vmem:[%s704 + $0x30] sm:$0xff]
        %v1012 = vld [vmem:[%s704 + $0x38] sm:$0xff]
        %v1013 = vld [vmem:[%s704 + $0x40] sm:$0xff]
        %v1014 = vld [vmem:[%s704 + $0x48] sm:$0xff]
        %v1015 = vld [vmem:[%s704 + $0x50] sm:$0xff]
        %v1016 = vld [vmem:[%s704 + $0x58] sm:$0xff]
        %v1017 = vld [vmem:[%s704 + $0x60] sm:$0xff]
        %v1018 = vld [vmem:[%s704 + $0x68] sm:$0xff]
        %v1019 = vld [vmem:[%s704 + $0x70] sm:$0xff]
        %v1020 = vld [vmem:[%s704 + $0x78] sm:$0xff]
        %v1021 = vld [vmem:[%s835] sm:$0x1]
        %v1023 = vperm.slane %v1021, 0
        %1025 = vmatpush.msra.mxu0 %v1020
        %1026 = vmatpush.msra.mxu0 %v1019
        %1027 = vmatpush.msra.mxu0 %v1018
        %1028 = vmatpush.msra.mxu0 %v1017
        %1029 = vmatpush.msra.mxu0 %v1016
        %1030 = vmatpush.msra.mxu0 %v1015
        %1031 = vmatpush.msra.mxu0 %v1014
        %1032 = vmatpush.msra.mxu0 %v1013
        %1033 = vmatpush.msra.mxu0 %v1012
        %1034 = vmatpush.msra.mxu0 %v1011
        %1035 = vmatpush.msra.mxu0 %v1010
        %1036 = vmatpush.msra.mxu0 %v1009
        %1037 = vmatpush.msra.mxu0 %v1008
        %1038 = vmatpush.msra.mxu0 %v1007
        %1039 = vmatpush.msra.mxu0 %v1006
        %1040 = vmatpush.msra.mxu0 %v1005
        %1041 = vmatmul.f32.gmra.mxu0 %v1003
        %v1042 = vpop.f32.mrf.mxu0
        %v1043 = vadd.f32 %v1023, %v1042
        %1044 = vmatmul.f32.gmra.mxu0 %v1004
        %v1045 = vpop.f32.mrf.mxu0
        %v1046 = vadd.f32 %v1023, %v1045
        %1047 = vdwg.mxu0
        %v1048 = vxor.u32 %v1043, 2147483648
        %v1049 = vxor.u32 %v1046, 2147483648
        %v1050 = vmul.f32 %v1048, 1.442695
        %v1051 = vpow.pop %v1050
        %v1052 = vmul.f32 %v1049, 1.442695
        %v1053 = vpow.pop %v1052
        %v1054 = vadd.f32 %v1051, 1.0
        %v1055 = vadd.f32 %v1053, 1.0
        %v1056 = vrcp.pop %v1054
        %v1057 = vmul.f32 %v1054, %v1056
        %v1058 = vsub.f32 1.0, %v1057
        %v1059 = vmul.f32 %v1056, %v1058
        %v1060 = vadd.f32 %v1056, %v1059
        %vm1061 = vweird.f32 %v1054
        %vm1062 = vweird.f32 %v1056
        %vm1063 = vmor %vm1061, %vm1062
        %v1064 = vsel %vm1063, %v1056, %v1060
        %v1065 = vand.u32 2147483647, %v1054
        %vm1066 = vcmp.eq.f32.partialorder %v1065, 8.507059e+37
        %v1067 = vand.u32 %v1054, 2147483648
        %v1068 = vor.u32 1.1754944e-38, %v1067
        %v1069 = vsel %vm1066, %v1068, %v1064
        %v1070 = vmul.f32 1.0, %v1069
        %v1071 = vrcp.pop %v1055
        %v1072 = vmul.f32 %v1055, %v1071
        %v1073 = vsub.f32 1.0, %v1072
        %v1074 = vmul.f32 %v1071, %v1073
        %v1075 = vadd.f32 %v1071, %v1074
        %vm1076 = vweird.f32 %v1055
        %vm1077 = vweird.f32 %v1071
        %vm1078 = vmor %vm1076, %vm1077
        %v1079 = vsel %vm1078, %v1071, %v1075
        %v1080 = vand.u32 2147483647, %v1055
        %vm1081 = vcmp.eq.f32.partialorder %v1080, 8.507059e+37
        %v1082 = vand.u32 %v1055, 2147483648
        %v1083 = vor.u32 1.1754944e-38, %v1082
        %v1084 = vsel %vm1081, %v1083, %v1079
        %v1085 = vmul.f32 1.0, %v1084
        %v1086 = vmul.f32 %v1043, %v1070
        %v1087 = vmul.f32 %v1046, %v1085
        %v1088 = vld [vmem:[%s714] sm:$0xff]
        %v1089 = vld [vmem:[%s714 + $0x8] sm:$0xff]
        %v1090 = vld [vmem:[%s714 + $0x10] sm:$0xff]
        %v1091 = vld [vmem:[%s714 + $0x18] sm:$0xff]
        %v1092 = vld [vmem:[%s714 + $0x20] sm:$0xff]
        %v1093 = vld [vmem:[%s714 + $0x28] sm:$0xff]
        %v1094 = vld [vmem:[%s714 + $0x30] sm:$0xff]
        %v1095 = vld [vmem:[%s714 + $0x38] sm:$0xff]
        %v1096 = vld [vmem:[%s714 + $0x40] sm:$0xff]
        %v1097 = vld [vmem:[%s714 + $0x48] sm:$0xff]
        %v1098 = vld [vmem:[%s714 + $0x50] sm:$0xff]
        %v1099 = vld [vmem:[%s714 + $0x58] sm:$0xff]
        %v1100 = vld [vmem:[%s714 + $0x60] sm:$0xff]
        %v1101 = vld [vmem:[%s714 + $0x68] sm:$0xff]
        %v1102 = vld [vmem:[%s714 + $0x70] sm:$0xff]
        %v1103 = vld [vmem:[%s714 + $0x78] sm:$0xff]
        %v1104 = vld [vmem:[%s723] sm:$0x1]
        %v1106 = vperm.slane %v1104, 0
        %1108 = vmatpush.msra.mxu0 %v1103
        %1109 = vmatpush.msra.mxu0 %v1102
        %1110 = vmatpush.msra.mxu0 %v1101
        %1111 = vmatpush.msra.mxu0 %v1100
        %1112 = vmatpush.msra.mxu0 %v1099
        %1113 = vmatpush.msra.mxu0 %v1098
        %1114 = vmatpush.msra.mxu0 %v1097
        %1115 = vmatpush.msra.mxu0 %v1096
        %1116 = vmatpush.msra.mxu0 %v1095
        %1117 = vmatpush.msra.mxu0 %v1094
        %1118 = vmatpush.msra.mxu0 %v1093
        %1119 = vmatpush.msra.mxu0 %v1092
        %1120 = vmatpush.msra.mxu0 %v1091
        %1121 = vmatpush.msra.mxu0 %v1090
        %1122 = vmatpush.msra.mxu0 %v1089
        %1123 = vmatpush.msra.mxu0 %v1088
        %1124 = vmatmul.f32.gmra.mxu0 %v1086
        %v1125 = vpop.f32.mrf.mxu0
        %v1126 = vadd.f32 %v1106, %v1125
        %1127 = vmatmul.f32.gmra.mxu0 %v1087
        %v1128 = vpop.f32.mrf.mxu0
        %v1129 = vadd.f32 %v1106, %v1128
        %1130 = vdwg.mxu0
        %v1131 = vxor.u32 %v1126, 2147483648
        %v1132 = vxor.u32 %v1129, 2147483648
        %v1133 = vmul.f32 %v1131, 1.442695
        %v1134 = vpow.pop %v1133
        %v1135 = vmul.f32 %v1132, 1.442695
        %v1136 = vpow.pop %v1135
        %v1137 = vadd.f32 %v1134, 1.0
        %v1138 = vadd.f32 %v1136, 1.0
        %v1139 = vrcp.pop %v1137
        %v1140 = vmul.f32 %v1137, %v1139
        %v1141 = vsub.f32 1.0, %v1140
        %v1142 = vmul.f32 %v1139, %v1141
        %v1143 = vadd.f32 %v1139, %v1142
        %vm1144 = vweird.f32 %v1137
        %vm1145 = vweird.f32 %v1139
        %vm1146 = vmor %vm1144, %vm1145
        %v1147 = vsel %vm1146, %v1139, %v1143
        %v1148 = vand.u32 2147483647, %v1137
        %vm1149 = vcmp.eq.f32.partialorder %v1148, 8.507059e+37
        %v1150 = vand.u32 %v1137, 2147483648
        %v1151 = vor.u32 1.1754944e-38, %v1150
        %v1152 = vsel %vm1149, %v1151, %v1147
        %v1153 = vmul.f32 1.0, %v1152
        %v1154 = vrcp.pop %v1138
        %v1155 = vmul.f32 %v1138, %v1154
        %v1156 = vsub.f32 1.0, %v1155
        %v1157 = vmul.f32 %v1154, %v1156
        %v1158 = vadd.f32 %v1154, %v1157
        %vm1159 = vweird.f32 %v1138
        %vm1160 = vweird.f32 %v1154
        %vm1161 = vmor %vm1159, %vm1160
        %v1162 = vsel %vm1161, %v1154, %v1158
        %v1163 = vand.u32 2147483647, %v1138
        %vm1164 = vcmp.eq.f32.partialorder %v1163, 8.507059e+37
        %v1165 = vand.u32 %v1138, 2147483648
        %v1166 = vor.u32 1.1754944e-38, %v1165
        %v1167 = vsel %vm1164, %v1166, %v1162
        %v1168 = vmul.f32 1.0, %v1167
        %v1169 = vmul.f32 %v1126, %v1153
        %v1170 = vmul.f32 %v1129, %v1168
        %v1171 = vld [vmem:[%s733] sm:$0xff]
        %v1172 = vld [vmem:[%s733 + $0x8] sm:$0xff]
        %v1173 = vld [vmem:[%s733 + $0x10] sm:$0xff]
        %v1174 = vld [vmem:[%s733 + $0x18] sm:$0xff]
        %v1175 = vld [vmem:[%s733 + $0x20] sm:$0xff]
        %v1176 = vld [vmem:[%s733 + $0x28] sm:$0xff]
        %v1177 = vld [vmem:[%s733 + $0x30] sm:$0xff]
        %v1178 = vld [vmem:[%s733 + $0x38] sm:$0xff]
        %v1179 = vld [vmem:[%s733 + $0x40] sm:$0xff]
        %v1180 = vld [vmem:[%s733 + $0x48] sm:$0xff]
        %v1181 = vld [vmem:[%s733 + $0x50] sm:$0xff]
        %v1182 = vld [vmem:[%s733 + $0x58] sm:$0xff]
        %v1183 = vld [vmem:[%s733 + $0x60] sm:$0xff]
        %v1184 = vld [vmem:[%s733 + $0x68] sm:$0xff]
        %v1185 = vld [vmem:[%s733 + $0x70] sm:$0xff]
        %v1186 = vld [vmem:[%s733 + $0x78] sm:$0xff]
        %v1187 = vld [vmem:[%s733 + $0x80] sm:$0xff]
        %v1188 = vld [vmem:[%s733 + $0x88] sm:$0xff]
        %v1189 = vld [vmem:[%s733 + $0x90] sm:$0xff]
        %v1190 = vld [vmem:[%s733 + $0x98] sm:$0xff]
        %v1191 = vld [vmem:[%s733 + $0xa0] sm:$0xff]
        %v1192 = vld [vmem:[%s733 + $0xa8] sm:$0xff]
        %v1193 = vld [vmem:[%s733 + $0xb0] sm:$0xff]
        %v1194 = vld [vmem:[%s733 + $0xb8] sm:$0xff]
        %v1195 = vld [vmem:[%s733 + $0xc0] sm:$0xff]
        %v1196 = vld [vmem:[%s733 + $0xc8] sm:$0xff]
        %v1197 = vld [vmem:[%s733 + $0xd0] sm:$0xff]
        %v1198 = vld [vmem:[%s733 + $0xd8] sm:$0xff]
        %v1199 = vld [vmem:[%s733 + $0xe0] sm:$0xff]
        %v1200 = vld [vmem:[%s733 + $0xe8] sm:$0xff]
        %v1201 = vld [vmem:[%s733 + $0xf0] sm:$0xff]
        %v1202 = vld [vmem:[%s733 + $0xf8] sm:$0xff]
        %v1203 = vld [vmem:[%s733 + $0x100] sm:$0xff]
        %v1204 = vld [vmem:[%s733 + $0x108] sm:$0xff]
        %v1205 = vld [vmem:[%s733 + $0x110] sm:$0xff]
        %v1206 = vld [vmem:[%s733 + $0x118] sm:$0xff]
        %v1207 = vld [vmem:[%s733 + $0x120] sm:$0xff]
        %v1208 = vld [vmem:[%s733 + $0x128] sm:$0xff]
        %v1209 = vld [vmem:[%s733 + $0x130] sm:$0xff]
        %v1210 = vld [vmem:[%s733 + $0x138] sm:$0xff]
        %v1211 = vld [vmem:[%s733 + $0x140] sm:$0xff]
        %v1212 = vld [vmem:[%s733 + $0x148] sm:$0xff]
        %v1213 = vld [vmem:[%s733 + $0x150] sm:$0xff]
        %v1214 = vld [vmem:[%s733 + $0x158] sm:$0xff]
        %v1215 = vld [vmem:[%s733 + $0x160] sm:$0xff]
        %v1216 = vld [vmem:[%s733 + $0x168] sm:$0xff]
        %v1217 = vld [vmem:[%s733 + $0x170] sm:$0xff]
        %v1218 = vld [vmem:[%s733 + $0x178] sm:$0xff]
        %v1219 = vld [vmem:[%s733 + $0x180] sm:$0xff]
        %v1220 = vld [vmem:[%s733 + $0x188] sm:$0xff]
        %v1221 = vld [vmem:[%s733 + $0x190] sm:$0xff]
        %v1222 = vld [vmem:[%s733 + $0x198] sm:$0xff]
        %v1223 = vld [vmem:[%s733 + $0x1a0] sm:$0xff]
        %v1224 = vld [vmem:[%s733 + $0x1a8] sm:$0xff]
        %v1225 = vld [vmem:[%s733 + $0x1b0] sm:$0xff]
        %v1226 = vld [vmem:[%s733 + $0x1b8] sm:$0xff]
        %v1227 = vld [vmem:[%s733 + $0x1c0] sm:$0xff]
        %v1228 = vld [vmem:[%s733 + $0x1c8] sm:$0xff]
        %v1229 = vld [vmem:[%s733 + $0x1d0] sm:$0xff]
        %v1230 = vld [vmem:[%s733 + $0x1d8] sm:$0xff]
        %v1231 = vld [vmem:[%s733 + $0x1e0] sm:$0xff]
        %v1232 = vld [vmem:[%s733 + $0x1e8] sm:$0xff]
        %v1233 = vld [vmem:[%s733 + $0x1f0] sm:$0xff]
        %v1234 = vld [vmem:[%s733 + $0x1f8] sm:$0xff]
        %v1235 = vld [vmem:[%s743] sm:$0xf]
        %v1237 = vperm.slane %v1235, 0
        %v1238 = vperm.slane %v1235, 1
        %v1239 = vperm.slane %v1235, 2
        %v1240 = vperm.slane %v1235, 3
        %1245 = vmatpush.msra.mxu0 %v1231
        %1246 = vmatpush.msra.mxu0 %v1227
        %1247 = vmatpush.msra.mxu0 %v1223
        %1248 = vmatpush.msra.mxu0 %v1219
        %1249 = vmatpush.msra.mxu0 %v1215
        %1250 = vmatpush.msra.mxu0 %v1211
        %1251 = vmatpush.msra.mxu0 %v1207
        %1252 = vmatpush.msra.mxu0 %v1203
        %1253 = vmatpush.msra.mxu0 %v1199
        %1254 = vmatpush.msra.mxu0 %v1195
        %1255 = vmatpush.msra.mxu0 %v1191
        %1256 = vmatpush.msra.mxu0 %v1187
        %1257 = vmatpush.msra.mxu0 %v1183
        %1258 = vmatpush.msra.mxu0 %v1179
        %1259 = vmatpush.msra.mxu0 %v1175
        %1260 = vmatpush.msra.mxu0 %v1171
        %1261 = vmatmul.f32.gmra.mxu0 %v1169
        %v1262 = vpop.f32.mrf.mxu0
        %v1263 = vadd.f32 %v1237, %v1262
        %1264 = vmatmul.f32.gmra.mxu0 %v1170
        %v1265 = vpop.f32.mrf.mxu0
        %v1266 = vadd.f32 %v1237, %v1265
        %1267 = vdwg.mxu0
        %1268 = vmatpush.msra.mxu0 %v1232
        %1269 = vmatpush.msra.mxu0 %v1228
        %1270 = vmatpush.msra.mxu0 %v1224
        %1271 = vmatpush.msra.mxu0 %v1220
        %1272 = vmatpush.msra.mxu0 %v1216
        %1273 = vmatpush.msra.mxu0 %v1212
        %1274 = vmatpush.msra.mxu0 %v1208
        %1275 = vmatpush.msra.mxu0 %v1204
        %1276 = vmatpush.msra.mxu0 %v1200
        %1277 = vmatpush.msra.mxu0 %v1196
        %1278 = vmatpush.msra.mxu0 %v1192
        %1279 = vmatpush.msra.mxu0 %v1188
        %1280 = vmatpush.msra.mxu0 %v1184
        %1281 = vmatpush.msra.mxu0 %v1180
        %1282 = vmatpush.msra.mxu0 %v1176
        %1283 = vmatpush.msra.mxu0 %v1172
        %1284 = vmatmul.f32.gmra.mxu0 %v1169
        %v1285 = vpop.f32.mrf.mxu0
        %v1286 = vadd.f32 %v1238, %v1285
        %1287 = vmatmul.f32.gmra.mxu0 %v1170
        %v1288 = vpop.f32.mrf.mxu0
        %v1289 = vadd.f32 %v1238, %v1288
        %1290 = vdwg.mxu0
        %1291 = vmatpush.msra.mxu0 %v1233
        %1292 = vmatpush.msra.mxu0 %v1229
        %1293 = vmatpush.msra.mxu0 %v1225
        %1294 = vmatpush.msra.mxu0 %v1221
        %1295 = vmatpush.msra.mxu0 %v1217
        %1296 = vmatpush.msra.mxu0 %v1213
        %1297 = vmatpush.msra.mxu0 %v1209
        %1298 = vmatpush.msra.mxu0 %v1205
        %1299 = vmatpush.msra.mxu0 %v1201
        %1300 = vmatpush.msra.mxu0 %v1197
        %1301 = vmatpush.msra.mxu0 %v1193
        %1302 = vmatpush.msra.mxu0 %v1189
        %1303 = vmatpush.msra.mxu0 %v1185
        %1304 = vmatpush.msra.mxu0 %v1181
        %1305 = vmatpush.msra.mxu0 %v1177
        %1306 = vmatpush.msra.mxu0 %v1173
        %1307 = vmatmul.f32.gmra.mxu0 %v1169
        %v1308 = vpop.f32.mrf.mxu0
        %v1309 = vadd.f32 %v1239, %v1308
        %1310 = vmatmul.f32.gmra.mxu0 %v1170
        %v1311 = vpop.f32.mrf.mxu0
        %v1312 = vadd.f32 %v1239, %v1311
        %1313 = vdwg.mxu0
        %1314 = vmatpush.msra.mxu0 %v1234
        %1315 = vmatpush.msra.mxu0 %v1230
        %1316 = vmatpush.msra.mxu0 %v1226
        %1317 = vmatpush.msra.mxu0 %v1222
        %1318 = vmatpush.msra.mxu0 %v1218
        %1319 = vmatpush.msra.mxu0 %v1214
        %1320 = vmatpush.msra.mxu0 %v1210
        %1321 = vmatpush.msra.mxu0 %v1206
        %1322 = vmatpush.msra.mxu0 %v1202
        %1323 = vmatpush.msra.mxu0 %v1198
        %1324 = vmatpush.msra.mxu0 %v1194
        %1325 = vmatpush.msra.mxu0 %v1190
        %1326 = vmatpush.msra.mxu0 %v1186
        %1327 = vmatpush.msra.mxu0 %v1182
        %1328 = vmatpush.msra.mxu0 %v1178
        %1329 = vmatpush.msra.mxu0 %v1174
        %1330 = vmatmul.f32.gmra.mxu0 %v1169
        %v1331 = vpop.f32.mrf.mxu0
        %v1332 = vadd.f32 %v1240, %v1331
        %1333 = vmatmul.f32.gmra.mxu0 %v1170
        %v1334 = vpop.f32.mrf.mxu0
        %v1335 = vadd.f32 %v1240, %v1334
        %1336 = vdwg.mxu0
        %v1337 = vld [vmem:[%s11] sm:$0x1]
        %v1338 = vld [vmem:[%s12] sm:$0x1]
        %v1340 = vperm.slane %v1337, 0
        %v1342 = vsub.f32 %v1340, %v1309
        %v1343 = vsub.f32 %v1340, %v1312
        %v1344 = vmax.f32 %v1342, 0.0
        %v1345 = vmax.f32 %v1343, 0.0
        %vm1346 = vcmp.ne.f32.partialorder %v1342, %v1342
        %vm1347 = vcmp.ne.f32.partialorder %v1343, %v1343
        %v1348 = vadd.f32 %v1342, 0.0
        %v1349 = vadd.f32 %v1343, 0.0
        %v1350 = vand.u32 2147483647, %v1342
        %v1351 = vand.u32 2147483647, %v1343
        %v1352 = vsub.f32 0.0, %v1350
        %v1353 = vsub.f32 0.0, %v1351
        %v1354 = vmul.f32 %v1352, 1.442695
        %v1355 = vpow.pop %v1354
        %v1356 = vmul.f32 %v1353, 1.442695
        %v1357 = vpow.pop %v1356
        %v1358 = vadd.f32 %v1355, 1.0
        %v1359 = vlog2.pop %v1358
        %v1360 = vmul.f32 %v1359, 0.6931472
        %v1361 = vmul.f32 -0.5, %v1355
        %v1362 = vadd.f32 %v1361, 1.0
        %v1363 = vmul.f32 %v1362, %v1355
        %v1364 = vand.u32 2147483647, %v1355
        %vm1365 = vcmp.lt.f32.partialorder %v1364, 0.0004427343
        %v1366 = vsel %vm1365, %v1363, %v1360
        %v1367 = vadd.f32 %v1357, 1.0
        %v1368 = vlog2.pop %v1367
        %v1369 = vmul.f32 %v1368, 0.6931472
        %v1370 = vmul.f32 -0.5, %v1357
        %v1371 = vadd.f32 %v1370, 1.0
        %v1372 = vmul.f32 %v1371, %v1357
        %v1373 = vand.u32 2147483647, %v1357
        %vm1374 = vcmp.lt.f32.partialorder %v1373, 0.0004427343
        %v1375 = vsel %vm1374, %v1372, %v1369
        %v1376 = vadd.f32 %v1344, %v1366
        %v1377 = vadd.f32 %v1345, %v1375
        %v1378 = vsel %vm1346, %v1348, %v1376
        %v1379 = vsel %vm1347, %v1349, %v1377
        %v1380 = vsub.f32 %v1340, %v1378
        %v1381 = vsub.f32 %v1340, %v1379
        %v1383 = vperm.slane %v1338, 0
        %v1385 = vsub.f32 %v1380, %v1383
        %v1386 = vsub.f32 %v1381, %v1383
        %v1387 = vmax.f32 %v1385, 0.0
        %v1388 = vmax.f32 %v1386, 0.0
        %vm1389 = vcmp.ne.f32.partialorder %v1385, %v1385
        %vm1390 = vcmp.ne.f32.partialorder %v1386, %v1386
        %v1391 = vadd.f32 %v1385, 0.0
        %v1392 = vadd.f32 %v1386, 0.0
        %v1393 = vand.u32 2147483647, %v1385
        %v1394 = vand.u32 2147483647, %v1386
        %v1395 = vsub.f32 0.0, %v1393
        %v1396 = vsub.f32 0.0, %v1394
        %v1397 = vmul.f32 %v1395, 1.442695
        %v1398 = vpow.pop %v1397
        %v1399 = vmul.f32 %v1396, 1.442695
        %v1400 = vpow.pop %v1399
        %v1401 = vadd.f32 %v1398, 1.0
        %v1402 = vlog2.pop %v1401
        %v1403 = vmul.f32 %v1402, 0.6931472
        %v1404 = vmul.f32 -0.5, %v1398
        %v1405 = vadd.f32 %v1404, 1.0
        %v1406 = vmul.f32 %v1405, %v1398
        %v1407 = vand.u32 2147483647, %v1398
        %vm1408 = vcmp.lt.f32.partialorder %v1407, 0.0004427343
        %v1409 = vsel %vm1408, %v1406, %v1403
        %v1410 = vadd.f32 %v1400, 1.0
        %v1411 = vlog2.pop %v1410
        %v1412 = vmul.f32 %v1411, 0.6931472
        %v1413 = vmul.f32 -0.5, %v1400
        %v1414 = vadd.f32 %v1413, 1.0
        %v1415 = vmul.f32 %v1414, %v1400
        %v1416 = vand.u32 2147483647, %v1400
        %vm1417 = vcmp.lt.f32.partialorder %v1416, 0.0004427343
        %v1418 = vsel %vm1417, %v1415, %v1412
        %v1419 = vadd.f32 %v1387, %v1409
        %v1420 = vadd.f32 %v1388, %v1418
        %v1421 = vsel %vm1389, %v1391, %v1419
        %v1422 = vsel %vm1390, %v1392, %v1420
        %v1423 = vadd.f32 %v1383, %v1421
        %v1424 = vadd.f32 %v1383, %v1422
        %v1425 = vsub.f32 %v1340, %v1332
        %v1426 = vsub.f32 %v1340, %v1335
        %v1427 = vmax.f32 %v1425, 0.0
        %v1428 = vmax.f32 %v1426, 0.0
        %vm1429 = vcmp.ne.f32.partialorder %v1425, %v1425
        %vm1430 = vcmp.ne.f32.partialorder %v1426, %v1426
        %v1431 = vadd.f32 %v1425, 0.0
        %v1432 = vadd.f32 %v1426, 0.0
        %v1433 = vand.u32 2147483647, %v1425
        %v1434 = vand.u32 2147483647, %v1426
        %v1435 = vsub.f32 0.0, %v1433
        %v1436 = vsub.f32 0.0, %v1434
        %v1437 = vmul.f32 %v1435, 1.442695
        %v1438 = vpow.pop %v1437
        %v1439 = vmul.f32 %v1436, 1.442695
        %v1440 = vpow.pop %v1439
        %v1441 = vadd.f32 %v1438, 1.0
        %v1442 = vlog2.pop %v1441
        %v1443 = vmul.f32 %v1442, 0.6931472
        %v1444 = vmul.f32 -0.5, %v1438
        %v1445 = vadd.f32 %v1444, 1.0
        %v1446 = vmul.f32 %v1445, %v1438
        %v1447 = vand.u32 2147483647, %v1438
        %vm1448 = vcmp.lt.f32.partialorder %v1447, 0.0004427343
        %v1449 = vsel %vm1448, %v1446, %v1443
        %v1450 = vadd.f32 %v1440, 1.0
        %v1451 = vlog2.pop %v1450
        %v1452 = vmul.f32 %v1451, 0.6931472
        %v1453 = vmul.f32 -0.5, %v1440
        %v1454 = vadd.f32 %v1453, 1.0
        %v1455 = vmul.f32 %v1454, %v1440
        %v1456 = vand.u32 2147483647, %v1440
        %vm1457 = vcmp.lt.f32.partialorder %v1456, 0.0004427343
        %v1458 = vsel %vm1457, %v1455, %v1452
        %v1459 = vadd.f32 %v1427, %v1449
        %v1460 = vadd.f32 %v1428, %v1458
        %v1461 = vsel %vm1429, %v1431, %v1459
        %v1462 = vsel %vm1430, %v1432, %v1460
        %v1463 = vsub.f32 %v1340, %v1461
        %v1464 = vsub.f32 %v1340, %v1462
        %v1465 = vsub.f32 %v1463, %v1383
        %v1466 = vsub.f32 %v1464, %v1383
        %v1467 = vmax.f32 %v1465, 0.0
        %v1468 = vmax.f32 %v1466, 0.0
        %vm1469 = vcmp.ne.f32.partialorder %v1465, %v1465
        %vm1470 = vcmp.ne.f32.partialorder %v1466, %v1466
        %v1471 = vadd.f32 %v1465, 0.0
        %v1472 = vadd.f32 %v1466, 0.0
        %v1473 = vand.u32 2147483647, %v1465
        %v1474 = vand.u32 2147483647, %v1466
        %v1475 = vsub.f32 0.0, %v1473
        %v1476 = vsub.f32 0.0, %v1474
        %v1477 = vmul.f32 %v1475, 1.442695
        %v1478 = vpow.pop %v1477
        %v1479 = vmul.f32 %v1476, 1.442695
        %v1480 = vpow.pop %v1479
        %v1481 = vadd.f32 %v1478, 1.0
        %v1482 = vlog2.pop %v1481
        %v1483 = vmul.f32 %v1482, 0.6931472
        %v1484 = vmul.f32 -0.5, %v1478
        %v1485 = vadd.f32 %v1484, 1.0
        %v1486 = vmul.f32 %v1485, %v1478
        %v1487 = vand.u32 2147483647, %v1478
        %vm1488 = vcmp.lt.f32.partialorder %v1487, 0.0004427343
        %v1489 = vsel %vm1488, %v1486, %v1483
        %v1490 = vadd.f32 %v1480, 1.0
        %v1491 = vlog2.pop %v1490
        %v1492 = vmul.f32 %v1491, 0.6931472
        %v1493 = vmul.f32 -0.5, %v1480
        %v1494 = vadd.f32 %v1493, 1.0
        %v1495 = vmul.f32 %v1494, %v1480
        %v1496 = vand.u32 2147483647, %v1480
        %vm1497 = vcmp.lt.f32.partialorder %v1496, 0.0004427343
        %v1498 = vsel %vm1497, %v1495, %v1492
        %v1499 = vadd.f32 %v1467, %v1489
        %v1500 = vadd.f32 %v1468, %v1498
        %v1501 = vsel %vm1469, %v1471, %v1499
        %v1502 = vsel %vm1470, %v1472, %v1500
        %v1503 = vadd.f32 %v1383, %v1501
        %v1504 = vadd.f32 %v1383, %v1502
        %v1505 = vadd.f32 %v1263, %v1286
        %v1506 = vadd.f32 %v1266, %v1289
        %v1507 = vmax.f32 %v1423, %v1503
        %v1508 = vmax.f32 %v1424, %v1504
        %v1509 = vsub.f32 %v1423, %v1503
        %v1510 = vsub.f32 %v1424, %v1504
        %vm1511 = vcmp.ne.f32.partialorder %v1509, %v1509
        %vm1512 = vcmp.ne.f32.partialorder %v1510, %v1510
        %v1513 = vadd.f32 %v1423, %v1503
        %v1514 = vadd.f32 %v1424, %v1504
        %v1515 = vand.u32 2147483647, %v1509
        %v1516 = vand.u32 2147483647, %v1510
        %v1517 = vsub.f32 0.0, %v1515
        %v1518 = vsub.f32 0.0, %v1516
        %v1519 = vmul.f32 %v1517, 1.442695
        %v1520 = vpow.pop %v1519
        %v1521 = vmul.f32 %v1518, 1.442695
        %v1522 = vpow.pop %v1521
        %v1523 = vadd.f32 %v1520, 1.0
        %v1524 = vlog2.pop %v1523
        %v1525 = vmul.f32 %v1524, 0.6931472
        %v1526 = vmul.f32 -0.5, %v1520
        %v1527 = vadd.f32 %v1526, 1.0
        %v1528 = vmul.f32 %v1527, %v1520
        %v1529 = vand.u32 2147483647, %v1520
        %vm1530 = vcmp.lt.f32.partialorder %v1529, 0.0004427343
        %v1531 = vsel %vm1530, %v1528, %v1525
        %v1532 = vadd.f32 %v1522, 1.0
        %v1533 = vlog2.pop %v1532
        %v1534 = vmul.f32 %v1533, 0.6931472
        %v1535 = vmul.f32 -0.5, %v1522
        %v1536 = vadd.f32 %v1535, 1.0
        %v1537 = vmul.f32 %v1536, %v1522
        %v1538 = vand.u32 2147483647, %v1522
        %vm1539 = vcmp.lt.f32.partialorder %v1538, 0.0004427343
        %v1540 = vsel %vm1539, %v1537, %v1534
        %v1541 = vadd.f32 %v1507, %v1531
        %v1542 = vadd.f32 %v1508, %v1540
        %v1543 = vsel %vm1511, %v1513, %v1541
        %v1544 = vsel %vm1512, %v1514, %v1542
        %v1545 = vmul.f32 %v1543, 1.442695
        %v1546 = vpow.pop %v1545
        %v1547 = vmul.f32 %v1544, 1.442695
        %v1548 = vpow.pop %v1547
        %1549 = vst [vmem:[%s831] sm:$0xff] %v1505
        %1550 = vst [vmem:[%s831 + $0x8] sm:$0xff] %v1546
        %1551 = vst [vmem:[%s831 + $0x10] sm:$0xff] %v1263
        %1552 = vst [vmem:[%s831 + $0x18] sm:$0xff] %v1286
        %1553 = vst [vmem:[%s831 + $0x20] sm:$0xff] %v1423
        %1554 = vst [vmem:[%s831 + $0x28] sm:$0xff] %v1503
        %1555 = vst [vmem:[%s831 + $0x30] sm:$0xff] %v1506
        %1556 = vst [vmem:[%s831 + $0x38] sm:$0xff] %v1548
        %1557 = vst [vmem:[%s831 + $0x40] sm:$0xff] %v1266
        %1558 = vst [vmem:[%s831 + $0x48] sm:$0xff] %v1289
        %1559 = vst [vmem:[%s831 + $0x50] sm:$0xff] %v1424
        %1560 = vst [vmem:[%s831 + $0x58] sm:$0xff] %v1504
        %s1561 = sand.u32 %s397, 1
        %s1562 = scalar_lea.sflag [#allocation4], %s1561
        %s1563 = sand.u32 %s397, 1
        %s1564 = smul.addr %s1563, 96
        %s1565 = scalar_lea.vmem [#allocation19], %s1564
        // Predicated region
        $region113: #{tpu_custom_call.1} parent=71 // pred_check
          %p1566 = pneg %p407
        $region114: #{tpu_custom_call.1} parent=71 // pred_check_branch
          %1568 = sbr.rel (%p1566) target = $region116
        $region115: #{tpu_custom_call.1} parent=71 // pred_region
          %s1569 = smul.u32 2, %s50
          %1571 = vsyncadd %s1562, 0
          %s1572 = smul.addr %s1569, 6
          %s1573 = smul.addr %s49, 12
          %s1574 = sadd.s32 %s1572, %s1573
          %s1575 = smul.addr %s1574, 8
          %s1576 = scalar_lea.hbm %s13, %s1575
          %s1577 = sshll.u32 %s1565, 4
          %s1578 = int_to_ptr.vmem [resolvable:$true] %s1577
          %s1579 = sshll.u32 %s1576, 4
          %s1580 = int_to_ptr.hbm [resolvable:$true] %s1579
          %1585 = dma.vmem_to_hbm [thread:$0]  %s1578, 1536, %s1580, %s1562, 768, 768, 48
        $region116: #{tpu_custom_call.1} parent=71 // pred_fallthru
          _
      $region72: #{tpu_custom_call.1} parent=5 // pred_fallthru
        _
      %p1586 = scmp.le.s32.totalorder 2, %s40
      // Predicated region
      $region117: #{tpu_custom_call.1} parent=5 // pred_check
        %p1587 = pneg %p1586
      $region118: #{tpu_custom_call.1} parent=5 // pred_check_branch
        %1589 = sbr.rel (%p1587) target = $region120
      $region119: #{tpu_custom_call.1} parent=5 // pred_region
        %s1590 = ssub.s32 %s40, 2
        // Predicated region
        $region121: #{tpu_custom_call.1} parent=119 // pred_check
          %p1591 = pneg %p413
        $region122: #{tpu_custom_call.1} parent=119 // pred_check_branch
          %1593 = sbr.rel (%p1591) target = $region124
        $region123: #{tpu_custom_call.1} parent=119 // pred_region
          %s1594 = sand.u32 %s398, 1
          %s1595 = scalar_lea.sflag [#allocation4], %s1594
          %s1596 = sand.u32 %s398, 1
          %s1597 = smul.addr %s1596, 96
          %s1598 = scalar_lea.vmem [#allocation19], %s1597
          %1600 = dma.done %s1595, 1536
        $region124: #{tpu_custom_call.1} parent=119 // pred_fallthru
          _
      $region120: #{tpu_custom_call.1} parent=5 // pred_fallthru
        _
    $region6: #{tpu_custom_call.1} parent=1 // loop_footer
      %s44 = sadd.s32 1, %s40
    $region7: #{tpu_custom_call.1} parent=1 // loop_footer_branch
      %39 = sbr.rel target = $region3
    $region8: #{tpu_custom_call.1} parent=1 // loop_exit
      _
    %1601 = vsyncpa [#allocation3], 1
    %s1602 = scalar_lea.sflag [#allocation3], 1
    %1603 = vsyncpa %s1602, 1
    %1604 = vsyncpa [#allocation6], 1
    %s1605 = scalar_lea.sflag [#allocation6], 1
    %1606 = vsyncpa %s1605, 1
    %1607 = vsyncpa [#allocation9], 1
    %s1608 = scalar_lea.sflag [#allocation9], 1
    %1609 = vsyncpa %s1608, 1
    %1610 = vsyncpa [#allocation12], 1
    %s1611 = scalar_lea.sflag [#allocation12], 1
    %1612 = vsyncpa %s1611, 1
    %1613 = vsyncpa [#allocation15], 1
    %s1614 = scalar_lea.sflag [#allocation15], 1
    %1615 = vsyncpa %s1614, 1
    %1616 = vsyncpa [#allocation18], 1
    %s1617 = scalar_lea.sflag [#allocation18], 1
    %1618 = vsyncpa %s1617, 1
    %1619 = vsyncpa [#allocation4], 1
    %s1620 = scalar_lea.sflag [#allocation4], 1
    %1621 = vsyncpa %s1620, 1

</llo_original>
